<compile_context>
chip_gen: v6e
topology: v6e:2x2x1
jax: 0.10.0
libtpu: 0.0.40
codegen_flags: <defaults>
</compile_context>

<pallas_src>
import functools

import jax
import jax.numpy as jnp
from jax.experimental import pallas as pl
from jax.experimental.pallas import tpu as pltpu


def eikonal_kernel(yi_ref, yt_ref, at_ref, mask_ref, o_ref,
                   max_acc, deg_acc, *, alpha, tj):
    j = pl.program_id(1)

    @pl.when(j == 0)
    def _():
        max_acc[...] = jnp.zeros_like(max_acc)
        deg_acc[...] = jnp.zeros_like(deg_acc)

    # Adjacency tile, transposed: at[jj, ii] = A[i0+ii, j0+jj].
    # j (reduction axis) on sublanes, i on lanes.
    at = at_ref[...]                           # [tj, ti]
    tj_, ti = at.shape
    sqrt_at = jnp.sqrt(at)                     # EUP; once per tile, shared over batch

    # deg[i] += sum_j A[i, j]: fold the sublane axis in groups of 8 so the
    # reduction is cross-vreg VPU adds; the 8-way sublane reduce is deferred
    # to the epilogue.
    deg_acc[...] += at.reshape(tj_ // 8, 8, ti).sum(axis=0)

    # y at the target nodes j of this tile, node axis on sublanes: [tj, B].
    j0 = pl.multiple_of(j * tj, tj)
    yj = yt_ref[pl.ds(j0, tj), :]

    B = yi_ref.shape[0]
    for b in range(B):                         # B is tiny & static -> unrolled
        yi_b = yi_ref[b:b + 1, :]              # [1, ti]  (i on lanes)
        yj_b = yj[:, b:b + 1]                  # [tj, 1]  (j on sublanes)
        # sqrt(w_ij) * (y_i - y_j).  The relu is implicit: the running max
        # starts at 0 and edges with y_i <= y_j contribute <= 0, matching the
        # reference value of exactly 0 for them.
        val = sqrt_at * (yi_b - yj_b)          # [tj, ti]   (2 VALU ops / vreg)
        part = val.reshape(tj_ // 8, 8, ti).max(axis=0)      # [8, ti], VPU maxes
        max_acc[b] = jnp.maximum(max_acc[b], part)

    @pl.when(j == pl.num_programs(1) - 1)
    def _():
        deg = jnp.sum(deg_acc[...], axis=0, keepdims=True)    # [1, ti] (epilogue-only XLU)
        has_edge = deg > 0.0
        safe_deg = jnp.where(has_edge, deg, 1.0)
        if alpha == 0.5:
            scale = jnp.sqrt(safe_deg)
        elif alpha == 1.0:
            scale = safe_deg
        else:
            scale = safe_deg ** alpha
        inv_scale = 1.0 / scale                               # exact divide, epilogue only
        m = mask_ref[...]                                     # [1, ti]
        for b in range(B):
            gmax_b = jnp.max(max_acc[b], axis=0, keepdims=True)        # [1, ti]
            grad_norm_b = jnp.where(has_edge, gmax_b * inv_scale, 0.0)
            o_ref[b:b + 1, :] = ((1.0 - grad_norm_b) * m).astype(o_ref.dtype)


def eikonal_forward(y, adj, mask, alpha, *, ti=256, tj=256):
    """y: [B, N] f32, adj: [N, N] f32 (nonnegative, adj[i, j] = weight of edge
    i->j), mask: [1, N] f32.  Returns [B, N] f32."""
    B, N = y.shape
    assert adj.shape == (N, N) and mask.shape == (1, N)
    ti = min(ti, N)
    tj = min(tj, N)
    # TODO(synk): pad adj/mask/y with zero rows/cols for N not a tile multiple
    # (zero-weight edges are semantically inert here).
    assert N % ti == 0 and N % tj == 0
    assert ti % 128 == 0 and tj % 8 == 0

    # Transposed operands so the j (reduction) axis lands on sublanes inside
    # the kernel; these are tiny one-off XLA transposes outside the kernel.
    adj_t = adj.T
    y_t = y.T

    kernel = functools.partial(eikonal_kernel, alpha=float(alpha), tj=tj)
    return pl.pallas_call(
        kernel,
        out_shape=jax.ShapeDtypeStruct((B, N), jnp.float32),
        grid_spec=pltpu.PrefetchScalarGridSpec(
            num_scalar_prefetch=0,
            grid=(N // ti, N // tj),       # i outer ("parallel"), j inner reduction
            in_specs=[
                pl.BlockSpec((B, ti), lambda i, j: (0, i)),    # y at source nodes i (lanes)
                pl.BlockSpec((N, B), lambda i, j: (0, 0)),     # y^T, fully resident in VMEM
                pl.BlockSpec((tj, ti), lambda i, j: (j, i)),   # A^T tile: dominant HBM stream
                pl.BlockSpec((1, ti), lambda i, j: (0, i)),    # mask tile
            ],
            out_specs=pl.BlockSpec((B, ti), lambda i, j: (0, i)),
            scratch_shapes=[
                pltpu.VMEM((B, 8, ti), jnp.float32),   # per-batch running max partials
                pltpu.VMEM((8, ti), jnp.float32),      # running degree partial sums
            ],
        ),
        compiler_params=pltpu.CompilerParams(
            dimension_semantics=("parallel", "arbitrary")),
    )(y, y_t, adj_t, mask)


def eikonal_reference(y, adj, mask, alpha):
    """Pure-JAX dense reference matching the torch_scatter semantics."""
    deg = adj.sum(axis=1)                                     # [N]
    diff = y[:, :, None] - y[:, None, :]                      # [B, Ni, Nj]
    val = jnp.sqrt(adj)[None, :, :] * jnp.maximum(diff, 0.0)
    gmax = val.max(axis=2)                                    # [B, N]
    safe = jnp.where(deg > 0.0, deg, 1.0) ** alpha
    grad_norm = jnp.where(deg > 0.0, gmax / safe, 0.0)
    return (1.0 - grad_norm) * mask


if __name__ == "__main__":
    B, N = 4, 512
    alpha = 0.5
    key = jax.random.PRNGKey(0)
    k_w, k_e, k_y, k_m = jax.random.split(key, 4)

    # Deterministic synthetic graph: sparse nonnegative adjacency (no checkpoint).
    weights = jax.random.uniform(k_w, (N, N), jnp.float32, 0.1, 1.0)
    edge_present = (jax.random.uniform(k_e, (N, N), jnp.float32) < 0.05)
    edge_present = edge_present & ~jnp.eye(N, dtype=bool)     # drop self loops
    adj = jnp.where(edge_present, weights, 0.0).astype(jnp.float32)

    y = jax.random.normal(k_y, (B, N), jnp.float32)
    mask = (jax.random.uniform(k_m, (1, N), jnp.float32) < 0.8).astype(jnp.float32)

    out = eikonal_forward(y, adj, mask, alpha)
    out = jax.block_until_ready(out)

    ref = eikonal_reference(y, adj, mask, alpha)
    assert out.shape == (B, N) and out.dtype == jnp.float32
    assert jnp.allclose(out, ref, atol=1e-5, rtol=1e-5), "mismatch vs reference"

    print("KERNEL_OK")
</pallas_src>

<mosaic_0001>
module attributes {stable_mosaic.version = 11 : i64} {
  func.func @eikonal_kernel(%arg0: i32, %arg1: i32, %arg2: memref<4x256xf32, #tpu.memory_space<vmem>>, %arg3: memref<512x4xf32, #tpu.memory_space<vmem>>, %arg4: memref<256x256xf32, #tpu.memory_space<vmem>>, %arg5: memref<1x256xf32, #tpu.memory_space<vmem>>, %arg6: memref<4x256xf32, #tpu.memory_space<vmem>>, %arg7: memref<4x8x256xf32, #tpu.memory_space<vmem>>, %arg8: memref<8x256xf32, #tpu.memory_space<vmem>>) attributes {dimension_semantics = [#tpu.dimension_semantics<parallel>, #tpu.dimension_semantics<arbitrary>], iteration_bounds = array<i64: 2, 2>, scalar_prefetch = 0 : i64, scratch_operands = 2 : i64, tpu.core_type = #tpu.core_type<tc>, window_params = [{transform_indices = @transform_0, window_bounds = array<i64: 4, 256>}, {pipeline_mode = #tpu.pipeline_mode<synchronous>, transform_indices = @transform_1, window_bounds = array<i64: 512, 4>}, {transform_indices = @transform_2, window_bounds = array<i64: 256, 256>}, {transform_indices = @transform_3, window_bounds = array<i64: 1, 256>}, {transform_indices = @transform_4, window_bounds = array<i64: 4, 256>}]} {
    %c0_i32 = arith.constant 0 : i32
    %0 = arith.cmpi eq, %arg1, %c0_i32 : i32
    %1 = arith.extui %0 : i1 to i32
    %c0_i32_0 = arith.constant 0 : i32
    %2 = arith.cmpi ne, %1, %c0_i32_0 : i32
    scf.if %2 {
      %cst_41 = arith.constant 0.000000e+00 : f32
      %73 = vector.broadcast %cst_41 : f32 to vector<4x8x256xf32>
      %c0_42 = arith.constant 0 : index
      %c0_43 = arith.constant 0 : index
      %c0_44 = arith.constant 0 : index
      %74 = vector.load %arg7[%c0_42, %c0_43, %c0_44] : memref<4x8x256xf32, #tpu.memory_space<vmem>>, vector<4x8x256xf32>
      tpu.vector_store %arg7[%c0_42, %c0_43, %c0_44], %73 {strides = array<i32>} : memref<4x8x256xf32, #tpu.memory_space<vmem>>, vector<4x8x256xf32>,
      %cst_45 = arith.constant 0.000000e+00 : f32
      %75 = vector.broadcast %cst_45 : f32 to vector<8x256xf32>
      %c0_46 = arith.constant 0 : index
      %c0_47 = arith.constant 0 : index
      %76 = vector.load %arg8[%c0_46, %c0_47] : memref<8x256xf32, #tpu.memory_space<vmem>>, vector<8x256xf32>
      tpu.vector_store %arg8[%c0_46, %c0_47], %75 {strides = array<i32>} : memref<8x256xf32, #tpu.memory_space<vmem>>, vector<8x256xf32>,
    } else {
    }
    %c0 = arith.constant 0 : index
    %c0_1 = arith.constant 0 : index
    %3 = vector.load %arg4[%c0, %c0_1] : memref<256x256xf32, #tpu.memory_space<vmem>>, vector<256x256xf32>
    %4 = math.sqrt %3 : vector<256x256xf32>
    %c0_2 = arith.constant 0 : index
    %c0_3 = arith.constant 0 : index
    %5 = vector.load %arg8[%c0_2, %c0_3] : memref<8x256xf32, #tpu.memory_space<vmem>>, vector<8x256xf32>
    %6 = vector.shape_cast %3 : vector<256x256xf32> to vector<32x8x256xf32>
    %cst = arith.constant dense<0.000000e+00> : vector<8x256xf32>
    %7 = vector.multi_reduction <add>, %6, %cst [0] : vector<32x8x256xf32> to vector<8x256xf32>
    %8 = arith.addf %5, %7 : vector<8x256xf32>
    %c0_4 = arith.constant 0 : index
    %c0_5 = arith.constant 0 : index
    %9 = vector.load %arg8[%c0_4, %c0_5] : memref<8x256xf32, #tpu.memory_space<vmem>>, vector<8x256xf32>
    tpu.vector_store %arg8[%c0_4, %c0_5], %8 {strides = array<i32>} : memref<8x256xf32, #tpu.memory_space<vmem>>, vector<8x256xf32>,
    %c256_i32 = arith.constant 256 : i32
    %10 = arith.muli %arg1, %c256_i32 : i32
    %11 = tpu.assume_multiple %10, 256 : i32
    %12 = arith.index_cast %11 : i32 to index
    %c0_6 = arith.constant 0 : index
    %13 = vector.load %arg3[%12, %c0_6] : memref<512x4xf32, #tpu.memory_space<vmem>>, vector<256x4xf32>
    %c0_7 = arith.constant 0 : index
    %c0_8 = arith.constant 0 : index
    %14 = vector.load %arg2[%c0_7, %c0_8] : memref<4x256xf32, #tpu.memory_space<vmem>>, vector<1x256xf32>
    %15 = vector.extract_strided_slice %13 {offsets = [0, 0], sizes = [256, 1], strides = [1, 1]} : vector<256x4xf32> to vector<256x1xf32>
    %16 = vector.broadcast %14 : vector<1x256xf32> to vector<256x256xf32>
    %17 = vector.broadcast %15 : vector<256x1xf32> to vector<256x256xf32>
    %18 = arith.subf %16, %17 : vector<256x256xf32>
    %19 = arith.mulf %4, %18 : vector<256x256xf32>
    %20 = vector.shape_cast %19 : vector<256x256xf32> to vector<32x8x256xf32>
    %cst_9 = arith.constant dense<0xFF800000> : vector<8x256xf32>
    %21 = vector.multi_reduction <maximumf>, %20, %cst_9 [0] : vector<32x8x256xf32> to vector<8x256xf32>
    %c0_10 = arith.constant 0 : index
    %c0_11 = arith.constant 0 : index
    %c0_12 = arith.constant 0 : index
    %22 = vector.load %arg7[%c0_10, %c0_11, %c0_12] : memref<4x8x256xf32, #tpu.memory_space<vmem>>, vector<1x8x256xf32>
    %23 = vector.shape_cast %22 : vector<1x8x256xf32> to vector<8x256xf32>
    %24 = arith.maximumf %23, %21 : vector<8x256xf32>
    %c0_13 = arith.constant 0 : index
    %c0_14 = arith.constant 0 : index
    %c0_15 = arith.constant 0 : index
    %25 = vector.load %arg7[%c0_13, %c0_14, %c0_15] : memref<4x8x256xf32, #tpu.memory_space<vmem>>, vector<1x8x256xf32>
    %26 = vector.shape_cast %25 : vector<1x8x256xf32> to vector<8x256xf32>
    %27 = vector.shape_cast %24 : vector<8x256xf32> to vector<1x8x256xf32>
    tpu.vector_store %arg7[%c0_13, %c0_14, %c0_15], %27 {strides = array<i32>} : memref<4x8x256xf32, #tpu.memory_space<vmem>>, vector<1x8x256xf32>,
    %c1 = arith.constant 1 : index
    %c0_16 = arith.constant 0 : index
    %28 = vector.load %arg2[%c1, %c0_16] : memref<4x256xf32, #tpu.memory_space<vmem>>, vector<1x256xf32>
    %29 = vector.extract_strided_slice %13 {offsets = [0, 1], sizes = [256, 1], strides = [1, 1]} : vector<256x4xf32> to vector<256x1xf32>
    %30 = vector.broadcast %28 : vector<1x256xf32> to vector<256x256xf32>
    %31 = vector.broadcast %29 : vector<256x1xf32> to vector<256x256xf32>
    %32 = arith.subf %30, %31 : vector<256x256xf32>
    %33 = arith.mulf %4, %32 : vector<256x256xf32>
    %34 = vector.shape_cast %33 : vector<256x256xf32> to vector<32x8x256xf32>
    %cst_17 = arith.constant dense<0xFF800000> : vector<8x256xf32>
    %35 = vector.multi_reduction <maximumf>, %34, %cst_17 [0] : vector<32x8x256xf32> to vector<8x256xf32>
    %c1_18 = arith.constant 1 : index
    %c0_19 = arith.constant 0 : index
    %c0_20 = arith.constant 0 : index
    %36 = vector.load %arg7[%c1_18, %c0_19, %c0_20] : memref<4x8x256xf32, #tpu.memory_space<vmem>>, vector<1x8x256xf32>
    %37 = vector.shape_cast %36 : vector<1x8x256xf32> to vector<8x256xf32>
    %38 = arith.maximumf %37, %35 : vector<8x256xf32>
    %c1_21 = arith.constant 1 : index
    %c0_22 = arith.constant 0 : index
    %c0_23 = arith.constant 0 : index
    %39 = vector.load %arg7[%c1_21, %c0_22, %c0_23] : memref<4x8x256xf32, #tpu.memory_space<vmem>>, vector<1x8x256xf32>
    %40 = vector.shape_cast %39 : vector<1x8x256xf32> to vector<8x256xf32>
    %41 = vector.shape_cast %38 : vector<8x256xf32> to vector<1x8x256xf32>
    tpu.vector_store %arg7[%c1_21, %c0_22, %c0_23], %41 {strides = array<i32>} : memref<4x8x256xf32, #tpu.memory_space<vmem>>, vector<1x8x256xf32>,
    %c2 = arith.constant 2 : index
    %c0_24 = arith.constant 0 : index
    %42 = vector.load %arg2[%c2, %c0_24] : memref<4x256xf32, #tpu.memory_space<vmem>>, vector<1x256xf32>
    %43 = vector.extract_strided_slice %13 {offsets = [0, 2], sizes = [256, 1], strides = [1, 1]} : vector<256x4xf32> to vector<256x1xf32>
    %44 = vector.broadcast %42 : vector<1x256xf32> to vector<256x256xf32>
    %45 = vector.broadcast %43 : vector<256x1xf32> to vector<256x256xf32>
    %46 = arith.subf %44, %45 : vector<256x256xf32>
    %47 = arith.mulf %4, %46 : vector<256x256xf32>
    %48 = vector.shape_cast %47 : vector<256x256xf32> to vector<32x8x256xf32>
    %cst_25 = arith.constant dense<0xFF800000> : vector<8x256xf32>
    %49 = vector.multi_reduction <maximumf>, %48, %cst_25 [0] : vector<32x8x256xf32> to vector<8x256xf32>
    %c2_26 = arith.constant 2 : index
    %c0_27 = arith.constant 0 : index
    %c0_28 = arith.constant 0 : index
    %50 = vector.load %arg7[%c2_26, %c0_27, %c0_28] : memref<4x8x256xf32, #tpu.memory_space<vmem>>, vector<1x8x256xf32>
    %51 = vector.shape_cast %50 : vector<1x8x256xf32> to vector<8x256xf32>
    %52 = arith.maximumf %51, %49 : vector<8x256xf32>
    %c2_29 = arith.constant 2 : index
    %c0_30 = arith.constant 0 : index
    %c0_31 = arith.constant 0 : index
    %53 = vector.load %arg7[%c2_29, %c0_30, %c0_31] : memref<4x8x256xf32, #tpu.memory_space<vmem>>, vector<1x8x256xf32>
    %54 = vector.shape_cast %53 : vector<1x8x256xf32> to vector<8x256xf32>
    %55 = vector.shape_cast %52 : vector<8x256xf32> to vector<1x8x256xf32>
    tpu.vector_store %arg7[%c2_29, %c0_30, %c0_31], %55 {strides = array<i32>} : memref<4x8x256xf32, #tpu.memory_space<vmem>>, vector<1x8x256xf32>,
    %c3 = arith.constant 3 : index
    %c0_32 = arith.constant 0 : index
    %56 = vector.load %arg2[%c3, %c0_32] : memref<4x256xf32, #tpu.memory_space<vmem>>, vector<1x256xf32>
    %57 = vector.extract_strided_slice %13 {offsets = [0, 3], sizes = [256, 1], strides = [1, 1]} : vector<256x4xf32> to vector<256x1xf32>
    %58 = vector.broadcast %56 : vector<1x256xf32> to vector<256x256xf32>
    %59 = vector.broadcast %57 : vector<256x1xf32> to vector<256x256xf32>
    %60 = arith.subf %58, %59 : vector<256x256xf32>
    %61 = arith.mulf %4, %60 : vector<256x256xf32>
    %62 = vector.shape_cast %61 : vector<256x256xf32> to vector<32x8x256xf32>
    %cst_33 = arith.constant dense<0xFF800000> : vector<8x256xf32>
    %63 = vector.multi_reduction <maximumf>, %62, %cst_33 [0] : vector<32x8x256xf32> to vector<8x256xf32>
    %c3_34 = arith.constant 3 : index
    %c0_35 = arith.constant 0 : index
    %c0_36 = arith.constant 0 : index
    %64 = vector.load %arg7[%c3_34, %c0_35, %c0_36] : memref<4x8x256xf32, #tpu.memory_space<vmem>>, vector<1x8x256xf32>
    %65 = vector.shape_cast %64 : vector<1x8x256xf32> to vector<8x256xf32>
    %66 = arith.maximumf %65, %63 : vector<8x256xf32>
    %c3_37 = arith.constant 3 : index
    %c0_38 = arith.constant 0 : index
    %c0_39 = arith.constant 0 : index
    %67 = vector.load %arg7[%c3_37, %c0_38, %c0_39] : memref<4x8x256xf32, #tpu.memory_space<vmem>>, vector<1x8x256xf32>
    %68 = vector.shape_cast %67 : vector<1x8x256xf32> to vector<8x256xf32>
    %69 = vector.shape_cast %66 : vector<8x256xf32> to vector<1x8x256xf32>
    tpu.vector_store %arg7[%c3_37, %c0_38, %c0_39], %69 {strides = array<i32>} : memref<4x8x256xf32, #tpu.memory_space<vmem>>, vector<1x8x256xf32>,
    %c1_i32 = arith.constant 1 : i32
    %70 = arith.cmpi eq, %arg1, %c1_i32 : i32
    %71 = arith.extui %70 : i1 to i32
    %c0_i32_40 = arith.constant 0 : i32
    %72 = arith.cmpi ne, %71, %c0_i32_40 : i32
    scf.if %72 {
      %c0_41 = arith.constant 0 : index
      %c0_42 = arith.constant 0 : index
      %73 = vector.load %arg8[%c0_41, %c0_42] : memref<8x256xf32, #tpu.memory_space<vmem>>, vector<8x256xf32>
      %cst_43 = arith.constant dense<0.000000e+00> : vector<256xf32>
      %74 = vector.multi_reduction <add>, %73, %cst_43 [0] : vector<8x256xf32> to vector<256xf32>
      %75 = vector.shape_cast %74 : vector<256xf32> to vector<1x256xf32>
      %cst_44 = arith.constant 0.000000e+00 : f32
      %76 = vector.broadcast %cst_44 : f32 to vector<1x256xf32>
      %77 = arith.cmpf ogt, %75, %76 : vector<1x256xf32>
      %cst_45 = arith.constant 1.000000e+00 : f32
      %78 = vector.broadcast %cst_45 : f32 to vector<1x256xf32>
      %79 = arith.select %77, %75, %78 : vector<1x256xi1>, vector<1x256xf32>
      %80 = math.sqrt %79 : vector<1x256xf32>
      %cst_46 = arith.constant 1.000000e+00 : f32
      %81 = vector.broadcast %cst_46 : f32 to vector<1x256xf32>
      %82 = arith.divf %81, %80 : vector<1x256xf32>
      %c0_47 = arith.constant 0 : index
      %c0_48 = arith.constant 0 : index
      %83 = vector.load %arg5[%c0_47, %c0_48] : memref<1x256xf32, #tpu.memory_space<vmem>>, vector<1x256xf32>
      %c0_49 = arith.constant 0 : index
      %c0_50 = arith.constant 0 : index
      %c0_51 = arith.constant 0 : index
      %84 = vector.load %arg7[%c0_49, %c0_50, %c0_51] : memref<4x8x256xf32, #tpu.memory_space<vmem>>, vector<1x8x256xf32>
      %85 = vector.shape_cast %84 : vector<1x8x256xf32> to vector<8x256xf32>
      %cst_52 = arith.constant dense<0xFF800000> : vector<256xf32>
      %86 = vector.multi_reduction <maximumf>, %85, %cst_52 [0] : vector<8x256xf32> to vector<256xf32>
      %87 = vector.shape_cast %86 : vector<256xf32> to vector<1x256xf32>
      %88 = arith.mulf %87, %82 : vector<1x256xf32>
      %cst_53 = arith.constant 0.000000e+00 : f32
      %89 = vector.broadcast %cst_53 : f32 to vector<1x256xf32>
      %90 = arith.select %77, %88, %89 : vector<1x256xi1>, vector<1x256xf32>
      %cst_54 = arith.constant 1.000000e+00 : f32
      %91 = vector.broadcast %cst_54 : f32 to vector<1x256xf32>
      %92 = arith.subf %91, %90 : vector<1x256xf32>
      %93 = arith.mulf %92, %83 : vector<1x256xf32>
      %c0_55 = arith.constant 0 : index
      %c0_56 = arith.constant 0 : index
      %94 = vector.load %arg6[%c0_55, %c0_56] : memref<4x256xf32, #tpu.memory_space<vmem>>, vector<1x256xf32>
      tpu.vector_store %arg6[%c0_55, %c0_56], %93 {strides = array<i32>} : memref<4x256xf32, #tpu.memory_space<vmem>>, vector<1x256xf32>,
      %c1_57 = arith.constant 1 : index
      %c0_58 = arith.constant 0 : index
      %c0_59 = arith.constant 0 : index
      %95 = vector.load %arg7[%c1_57, %c0_58, %c0_59] : memref<4x8x256xf32, #tpu.memory_space<vmem>>, vector<1x8x256xf32>
      %96 = vector.shape_cast %95 : vector<1x8x256xf32> to vector<8x256xf32>
      %cst_60 = arith.constant dense<0xFF800000> : vector<256xf32>
      %97 = vector.multi_reduction <maximumf>, %96, %cst_60 [0] : vector<8x256xf32> to vector<256xf32>
      %98 = vector.shape_cast %97 : vector<256xf32> to vector<1x256xf32>
      %99 = arith.mulf %98, %82 : vector<1x256xf32>
      %cst_61 = arith.constant 0.000000e+00 : f32
      %100 = vector.broadcast %cst_61 : f32 to vector<1x256xf32>
      %101 = arith.select %77, %99, %100 : vector<1x256xi1>, vector<1x256xf32>
      %cst_62 = arith.constant 1.000000e+00 : f32
      %102 = vector.broadcast %cst_62 : f32 to vector<1x256xf32>
      %103 = arith.subf %102, %101 : vector<1x256xf32>
      %104 = arith.mulf %103, %83 : vector<1x256xf32>
      %c1_63 = arith.constant 1 : index
      %c0_64 = arith.constant 0 : index
      %105 = vector.load %arg6[%c1_63, %c0_64] : memref<4x256xf32, #tpu.memory_space<vmem>>, vector<1x256xf32>
      tpu.vector_store %arg6[%c1_63, %c0_64], %104 {strides = array<i32>} : memref<4x256xf32, #tpu.memory_space<vmem>>, vector<1x256xf32>,
      %c2_65 = arith.constant 2 : index
      %c0_66 = arith.constant 0 : index
      %c0_67 = arith.constant 0 : index
      %106 = vector.load %arg7[%c2_65, %c0_66, %c0_67] : memref<4x8x256xf32, #tpu.memory_space<vmem>>, vector<1x8x256xf32>
      %107 = vector.shape_cast %106 : vector<1x8x256xf32> to vector<8x256xf32>
      %cst_68 = arith.constant dense<0xFF800000> : vector<256xf32>
      %108 = vector.multi_reduction <maximumf>, %107, %cst_68 [0] : vector<8x256xf32> to vector<256xf32>
      %109 = vector.shape_cast %108 : vector<256xf32> to vector<1x256xf32>
      %110 = arith.mulf %109, %82 : vector<1x256xf32>
      %cst_69 = arith.constant 0.000000e+00 : f32
      %111 = vector.broadcast %cst_69 : f32 to vector<1x256xf32>
      %112 = arith.select %77, %110, %111 : vector<1x256xi1>, vector<1x256xf32>
      %cst_70 = arith.constant 1.000000e+00 : f32
      %113 = vector.broadcast %cst_70 : f32 to vector<1x256xf32>
      %114 = arith.subf %113, %112 : vector<1x256xf32>
      %115 = arith.mulf %114, %83 : vector<1x256xf32>
      %c2_71 = arith.constant 2 : index
      %c0_72 = arith.constant 0 : index
      %116 = vector.load %arg6[%c2_71, %c0_72] : memref<4x256xf32, #tpu.memory_space<vmem>>, vector<1x256xf32>
      tpu.vector_store %arg6[%c2_71, %c0_72], %115 {strides = array<i32>} : memref<4x256xf32, #tpu.memory_space<vmem>>, vector<1x256xf32>,
      %c3_73 = arith.constant 3 : index
      %c0_74 = arith.constant 0 : index
      %c0_75 = arith.constant 0 : index
      %117 = vector.load %arg7[%c3_73, %c0_74, %c0_75] : memref<4x8x256xf32, #tpu.memory_space<vmem>>, vector<1x8x256xf32>
      %118 = vector.shape_cast %117 : vector<1x8x256xf32> to vector<8x256xf32>
      %cst_76 = arith.constant dense<0xFF800000> : vector<256xf32>
      %119 = vector.multi_reduction <maximumf>, %118, %cst_76 [0] : vector<8x256xf32> to vector<256xf32>
      %120 = vector.shape_cast %119 : vector<256xf32> to vector<1x256xf32>
      %121 = arith.mulf %120, %82 : vector<1x256xf32>
      %cst_77 = arith.constant 0.000000e+00 : f32
      %122 = vector.broadcast %cst_77 : f32 to vector<1x256xf32>
      %123 = arith.select %77, %121, %122 : vector<1x256xi1>, vector<1x256xf32>
      %cst_78 = arith.constant 1.000000e+00 : f32
      %124 = vector.broadcast %cst_78 : f32 to vector<1x256xf32>
      %125 = arith.subf %124, %123 : vector<1x256xf32>
      %126 = arith.mulf %125, %83 : vector<1x256xf32>
      %c3_79 = arith.constant 3 : index
      %c0_80 = arith.constant 0 : index
      %127 = vector.load %arg6[%c3_79, %c0_80] : memref<4x256xf32, #tpu.memory_space<vmem>>, vector<1x256xf32>
      tpu.vector_store %arg6[%c3_79, %c0_80], %126 {strides = array<i32>} : memref<4x256xf32, #tpu.memory_space<vmem>>, vector<1x256xf32>,
    } else {
    }
    return
  }
  func.func @transform_0(%arg0: i32, %arg1: i32) -> (i32, i32) {
    %c0_i32 = arith.constant 0 : i32
    %c0_i32_0 = arith.constant 0 : i32
    return %c0_i32, %arg0 : i32, i32
  }
  func.func @transform_1(%arg0: i32, %arg1: i32) -> (i32, i32) {
    %c0_i32 = arith.constant 0 : i32
    %c0_i32_0 = arith.constant 0 : i32
    %c0_i32_1 = arith.constant 0 : i32
    return %c0_i32, %c0_i32_0 : i32, i32
  }
  func.func @transform_2(%arg0: i32, %arg1: i32) -> (i32, i32) {
    %c0_i32 = arith.constant 0 : i32
    return %arg1, %arg0 : i32, i32
  }
  func.func @transform_3(%arg0: i32, %arg1: i32) -> (i32, i32) {
    %c0_i32 = arith.constant 0 : i32
    %c0_i32_0 = arith.constant 0 : i32
    return %c0_i32, %arg0 : i32, i32
  }
  func.func @transform_4(%arg0: i32, %arg1: i32) -> (i32, i32) {
    %c0_i32 = arith.constant 0 : i32
    %c0_i32_0 = arith.constant 0 : i32
    return %c0_i32, %arg0 : i32, i32
  }
}

</mosaic_0001>

<llo_original>
// kernel: tpu_custom_call.1
$region0: #{tpu_custom_call.1}
  #allocation0 [shape = 'u32[]', space=smem, size = 0x4, offset = 0x4, fixed_abs, tag = 'smem constant byte address 0x4 - core index']
  #allocation1 [shape = 'u32[144,128]{1,0:T(1,128)}', space=vmem, size = 0x12000, scoped, tag = 'internal scratch']
  #allocation2 [shape = 'f32[4,8,256]{2,1,0:T(8,128)}', space=vmem, size = 0x8000, scoped, tag = 'scratch operand']
  #allocation3 [shape = 'f32[8,256]{1,0:T(8,128)}', space=vmem, size = 0x2000, scoped, tag = 'scratch operand']
  %s0 = inlined_call_operand.vmem [shape: f32[4,512], index: 0, kind: input, shape index: {}]
  %s1 = inlined_call_operand.vmem [shape: f32[512,4], index: 1, kind: input, shape index: {}]
  %s2 = inlined_call_operand.hbm [shape: f32[512,512], index: 2, kind: input, shape index: {}]
  %s3 = inlined_call_operand.vmem [shape: f32[1,512], index: 3, kind: input, shape index: {}]
  %s4 = inlined_call_operand.hbm [shape: f32[4,512], index: 4, kind: output, shape index: {}]
  %s5 = sld [smem:[#allocation0]]
  $region61: #{tpu_custom_call.1} parent=0
    _
  %s7 = ssub.s32 1, %s5
  %s8 = scalar_select 0, %s7, %s5
  $region1: #{tpu_custom_call.1} parent=0
    #allocation4 [shape = 'u8[524288]{0}', space=vmem, size = 0x80000, scoped, tag = 'input window, operand 2']
    #allocation5 [shape = 's32[2]{0}', space=sflag, size = 0x8, scoped, tag = 'scoped memory for tpu_custom_call.1']
    #allocation6 [shape = 's32[2]{0}', space=sflag, size = 0x8, scoped, tag = 'scoped memory for tpu_custom_call.1']
    #allocation7 [shape = 'u8[8192]{0}', space=vmem, size = 0x2000, scoped, tag = 'output window, operand 0']
    %9 = vsyncpa [#allocation5], 0
    %s10 = scalar_lea.sflag [#allocation5], 1
    %11 = vsyncpa %s10, 0
    %12 = vsyncpa [#allocation6], 0
    %s13 = scalar_lea.sflag [#allocation6], 1
    %14 = vsyncpa %s13, 0
    loop: start=0, step=1, limit=6
    $region2: #{tpu_custom_call.1} parent=1 // loop_pre_header
      _
    $region3: #{tpu_custom_call.1} parent=1 // loop_header
      %s16 = sphi 0, %s20
      %p17 = scmp.ge.s32.totalorder %s16, 6
      %s23 = sphi 0, %s35
      %s24 = sphi 0, %s31
      %s25 = sphi 0, %s23
      %s26 = sphi 0, %s24
      %s27 = sphi 0, %s25
      %s28 = sphi 0, %s26
      %s38 = sphi 0, %s40
      %s41 = sphi 0, %s38
      %s42 = sphi 0, %s41
      %s58 = sphi 0, %s42
      %s62 = sphi 0, %s62
      %s64 = sphi 0, %s62
      %s65 = sphi 0, %s64
      %s79 = sphi 0, %s65
      %s87 = sphi 0, %s89
      %s90 = sphi 0, %s87
      %s91 = sphi 0, %s90
      %s107 = sphi 0, %s91
      %s113 = sphi 0, %s115
      %s116 = sphi 0, %s113
      %s117 = sphi 0, %s116
      %s133 = sphi 0, %s117
      %s139 = sphi 0, %s141
      %s142 = sphi 0, %s139
      %s143 = sphi 0, %s142
      %s159 = sphi 0, %s143
    $region4: #{tpu_custom_call.1} parent=1 // loop_header_branch
      %19 = sbr.rel (%p17) target = $region8
    $region5: #{tpu_custom_call.1} parent=1 // loop_body
      %s21 = ssub.s32 %s16, 1
      %s22 = ssub.s32 %s16, 2
      %s29 = sadd.s32 1, %s24
      %p30 = scmp.ge.s32.totalorder %s29, 2
      %s31 = scalar_select %p30, 0, %s29
      %s32 = sadd.s32 1, %s23
      %s33 = scalar_select %p30, %s32, %s23
      %p34 = scmp.ge.s32.totalorder %s33, 2
      %s35 = scalar_select %p34, 0, %s33
      %s36 = ssub.s32 %s23, %s35
      %p37 = scmp.eq.s32.totalorder %s36, 0
      %s39 = sadd.s32 %s38, 1
      %s40 = scalar_select %p37, %s38, %s39
      %p43 = pneg %p37
      %p44 = scmp.eq.s32.totalorder %s16, 3
      %p45 = por %p43, %p44
      %p46 = scmp.ne.s32.totalorder %s38, %s41
      %p47 = scmp.eq.s32.totalorder %s16, 0
      %p48 = por %p46, %p47
      %p49 = scmp.ne.s32.totalorder %s38, %s41
      %p50 = scmp.eq.s32.totalorder %s21, 3
      %p51 = por %p49, %p50
      %p52 = scmp.ne.s32.totalorder %s41, %s42
      %p53 = scmp.eq.s32.totalorder %s21, 0
      %p54 = por %p52, %p53
      %p55 = scmp.ne.s32.totalorder %s41, %s42
      %p56 = scmp.eq.s32.totalorder %s22, 3
      %p57 = por %p55, %p56
      %p59 = scmp.ne.s32.totalorder %s42, %s58
      %p60 = scmp.eq.s32.totalorder %s22, 0
      %p61 = por %p59, %p60
      %s63 = sadd.s32 %s62, 1
      %p66 = scmp.eq.s32.totalorder %s16, 3
      %p67 = scmp.ne.s32.totalorder %s62, %s64
      %p68 = scmp.eq.s32.totalorder %s16, 0
      %p69 = por %p67, %p68
      %p70 = scmp.ne.s32.totalorder %s62, %s64
      %p71 = scmp.eq.s32.totalorder %s21, 3
      %p72 = por %p70, %p71
      %p73 = scmp.ne.s32.totalorder %s64, %s65
      %p74 = scmp.eq.s32.totalorder %s21, 0
      %p75 = por %p73, %p74
      %p76 = scmp.ne.s32.totalorder %s64, %s65
      %p77 = scmp.eq.s32.totalorder %s22, 3
      %p78 = por %p76, %p77
      %p80 = scmp.ne.s32.totalorder %s65, %s79
      %p81 = scmp.eq.s32.totalorder %s22, 0
      %p82 = por %p80, %p81
      %s83 = ssub.s32 %s24, %s31
      %s84 = ssub.s32 %s23, %s35
      %s85 = sor.u32 %s83, %s84
      %p86 = scmp.eq.s32.totalorder %s85, 0
      %s88 = sadd.s32 %s87, 1
      %s89 = scalar_select %p86, %s87, %s88
      %p92 = pneg %p86
      %p93 = scmp.eq.s32.totalorder %s16, 3
      %p94 = por %p92, %p93
      %p95 = scmp.ne.s32.totalorder %s87, %s90
      %p96 = scmp.eq.s32.totalorder %s16, 0
      %p97 = por %p95, %p96
      %p98 = scmp.ne.s32.totalorder %s87, %s90
      %p99 = scmp.eq.s32.totalorder %s21, 3
      %p100 = por %p98, %p99
      %p101 = scmp.ne.s32.totalorder %s90, %s91
      %p102 = scmp.eq.s32.totalorder %s21, 0
      %p103 = por %p101, %p102
      %p104 = scmp.ne.s32.totalorder %s90, %s91
      %p105 = scmp.eq.s32.totalorder %s22, 3
      %p106 = por %p104, %p105
      %p108 = scmp.ne.s32.totalorder %s91, %s107
      %p109 = scmp.eq.s32.totalorder %s22, 0
      %p110 = por %p108, %p109
      %s111 = ssub.s32 %s23, %s35
      %p112 = scmp.eq.s32.totalorder %s111, 0
      %s114 = sadd.s32 %s113, 1
      %s115 = scalar_select %p112, %s113, %s114
      %p118 = pneg %p112
      %p119 = scmp.eq.s32.totalorder %s16, 3
      %p120 = por %p118, %p119
      %p121 = scmp.ne.s32.totalorder %s113, %s116
      %p122 = scmp.eq.s32.totalorder %s16, 0
      %p123 = por %p121, %p122
      %p124 = scmp.ne.s32.totalorder %s113, %s116
      %p125 = scmp.eq.s32.totalorder %s21, 3
      %p126 = por %p124, %p125
      %p127 = scmp.ne.s32.totalorder %s116, %s117
      %p128 = scmp.eq.s32.totalorder %s21, 0
      %p129 = por %p127, %p128
      %p130 = scmp.ne.s32.totalorder %s116, %s117
      %p131 = scmp.eq.s32.totalorder %s22, 3
      %p132 = por %p130, %p131
      %p134 = scmp.ne.s32.totalorder %s117, %s133
      %p135 = scmp.eq.s32.totalorder %s22, 0
      %p136 = por %p134, %p135
      %s137 = ssub.s32 %s23, %s35
      %p138 = scmp.eq.s32.totalorder %s137, 0
      %s140 = sadd.s32 %s139, 1
      %s141 = scalar_select %p138, %s139, %s140
      %p144 = pneg %p138
      %p145 = scmp.eq.s32.totalorder %s16, 3
      %p146 = por %p144, %p145
      %p147 = scmp.ne.s32.totalorder %s139, %s142
      %p148 = scmp.eq.s32.totalorder %s16, 0
      %p149 = por %p147, %p148
      %p150 = scmp.ne.s32.totalorder %s139, %s142
      %p151 = scmp.eq.s32.totalorder %s21, 3
      %p152 = por %p150, %p151
      %p153 = scmp.ne.s32.totalorder %s142, %s143
      %p154 = scmp.eq.s32.totalorder %s21, 0
      %p155 = por %p153, %p154
      %p156 = scmp.ne.s32.totalorder %s142, %s143
      %p157 = scmp.eq.s32.totalorder %s22, 3
      %p158 = por %p156, %p157
      %p160 = scmp.ne.s32.totalorder %s143, %s159
      %p161 = scmp.eq.s32.totalorder %s22, 0
      %p162 = por %p160, %p161
      %p163 = scmp.le.s32.totalorder 1, %s16
      %p164 = scmp.lt.s32.totalorder %s16, 5
      %p165 = pnand %p163, %p164
      %p166 = pneg %p165
      // Predicated region
      $region9: #{tpu_custom_call.1} parent=5 // pred_check
        _
      $region10: #{tpu_custom_call.1} parent=5 // pred_check_branch
        %168 = sbr.rel (%p165) target = $region12
      $region11: #{tpu_custom_call.1} parent=5 // pred_region
        %s169 = ssub.s32 %s16, 1
        // Predicated region
        $region13: #{tpu_custom_call.1} parent=11 // pred_check
          %p170 = pneg %p75
        $region14: #{tpu_custom_call.1} parent=11 // pred_check_branch
          %172 = sbr.rel (%p170) target = $region16
        $region15: #{tpu_custom_call.1} parent=11 // pred_region
          _
        $region16: #{tpu_custom_call.1} parent=11 // pred_fallthru
          _
      $region12: #{tpu_custom_call.1} parent=5 // pred_fallthru
        _
      %p173 = scmp.lt.s32.totalorder %s16, 4
      // Predicated region
      $region17: #{tpu_custom_call.1} parent=5 // pred_check
        %p174 = pneg %p173
      $region18: #{tpu_custom_call.1} parent=5 // pred_check_branch
        %176 = sbr.rel (%p174) target = $region20
      $region19: #{tpu_custom_call.1} parent=5 // pred_region
        // Predicated region
        $region21: #{tpu_custom_call.1} parent=19 // pred_check
          %p177 = pneg %p48
        $region22: #{tpu_custom_call.1} parent=19 // pred_check_branch
          %179 = sbr.rel (%p177) target = $region24
        $region23: #{tpu_custom_call.1} parent=19 // pred_region
          %s180 = smul.u32 2, %s23
          %p181 = scmp.lt.s32.totalorder %s180, 3
          %s182 = scalar_select %p181, %s180, 3
          %s183 = smul.addr %s182, 4
          %s184 = scalar_lea.vmem %s0, %s183
          %s185 = smul.u32 2, %s23
        $region24: #{tpu_custom_call.1} parent=19 // pred_fallthru
          _
        // Predicated region
        $region25: #{tpu_custom_call.1} parent=19 // pred_check
          %p186 = pneg %p97
        $region26: #{tpu_custom_call.1} parent=19 // pred_check_branch
          %188 = sbr.rel (%p186) target = $region28
        $region27: #{tpu_custom_call.1} parent=19 // pred_region
          %s189 = sand.u32 %s87, 1
          %s190 = scalar_lea.sflag [#allocation5], %s189
          %s191 = sand.u32 %s87, 1
          %s192 = smul.addr %s191, 512
          %s193 = scalar_lea.vmem [#allocation4], %s192
          %s194 = smul.u32 32, %s24
          %s195 = smul.u32 2, %s23
          %s197 = ssub.s32 8192, 8192
          %198 = vsyncadd %s190, %s197
          %s199 = smul.addr %s194, 4
          %s200 = sadd.s32 %s195, %s199
          %s201 = smul.addr %s200, 128
          %s202 = scalar_lea.hbm %s2, %s201
          %s203 = sshll.u32 %s193, 4
          %s204 = int_to_ptr.vmem [resolvable:$true] %s203
          %209 = dma.hbm_to_vmem [thread:$0]  %s202, 8192, %s204, %s190, 512, 256, 16
        $region28: #{tpu_custom_call.1} parent=19 // pred_fallthru
          _
        // Predicated region
        $region29: #{tpu_custom_call.1} parent=19 // pred_check
          %p210 = pneg %p123
        $region30: #{tpu_custom_call.1} parent=19 // pred_check_branch
          %212 = sbr.rel (%p210) target = $region32
        $region31: #{tpu_custom_call.1} parent=19 // pred_region
          %s213 = smul.u32 2, %s23
          %p214 = scmp.lt.s32.totalorder %s213, 3
          %s215 = scalar_select %p214, %s213, 3
          %s216 = scalar_lea.vmem %s3, %s215
          %s217 = smul.u32 2, %s23
        $region32: #{tpu_custom_call.1} parent=19 // pred_fallthru
          _
      $region20: #{tpu_custom_call.1} parent=5 // pred_fallthru
        _
      %p218 = scmp.le.s32.totalorder 1, %s16
      %p219 = scmp.lt.s32.totalorder %s16, 5
      %p220 = pnand %p218, %p219
      %p221 = pneg %p220
      // Predicated region
      $region33: #{tpu_custom_call.1} parent=5 // pred_check
        _
      $region34: #{tpu_custom_call.1} parent=5 // pred_check_branch
        %223 = sbr.rel (%p220) target = $region36
      $region35: #{tpu_custom_call.1} parent=5 // pred_region
        %s224 = ssub.s32 %s16, 1
        %s225 = sand.u32 %s90, 1
        %s226 = scalar_lea.sflag [#allocation5], %s225
        %s227 = sand.u32 %s90, 1
        %s228 = smul.addr %s227, 512
        %s229 = scalar_lea.vmem [#allocation4], %s228
        // Predicated region
        $region37: #{tpu_custom_call.1} parent=35 // pred_check
          %p230 = pneg %p103
        $region38: #{tpu_custom_call.1} parent=35 // pred_check_branch
          %232 = sbr.rel (%p230) target = $region40
        $region39: #{tpu_custom_call.1} parent=35 // pred_region
          %233 = dma.done %s226, 8192
        $region40: #{tpu_custom_call.1} parent=35 // pred_fallthru
          _
        %s234 = smul.u32 2, %s25
        %p235 = scmp.lt.s32.totalorder %s234, 3
        %s236 = scalar_select %p235, %s234, 3
        %s237 = smul.addr %s236, 4
        %s238 = scalar_lea.vmem %s0, %s237
        %p239 = pneg %p54
        %p240 = pneg %p51
        %p241 = pneg %p75
        %p242 = pneg %p72
        %s243 = sand.u32 %s90, 1
        %s244 = scalar_lea.sflag [#allocation5], %s243
        %s245 = sand.u32 %s90, 1
        %s246 = smul.addr %s245, 512
        %s247 = scalar_lea.vmem [#allocation4], %s246
        %p248 = pneg %p103
        %p249 = pneg %p100
        %s250 = smul.u32 2, %s25
        %p251 = scmp.lt.s32.totalorder %s250, 3
        %s252 = scalar_select %p251, %s250, 3
        %s253 = scalar_lea.vmem %s3, %s252
        %p254 = pneg %p129
        %p255 = pneg %p126
        %p256 = pneg %p155
        %p257 = pneg %p152
        %s258 = sand.u32 %s142, 1
        %s259 = scalar_lea.sflag [#allocation6], %s258
        %s260 = sand.u32 %s142, 1
        %s261 = smul.addr %s260, 8
        %s262 = scalar_lea.vmem [#allocation7], %s261
        %s263 = smul.u32 2, %s25
        %p264 = scmp.lt.s32.totalorder %s263, 3
        %s265 = scalar_select %p264, %s263, 3
        %s266 = smul.addr %s265, 4
        %s267 = scalar_lea.vmem %s0, %s266
        %s268 = smul.u32 2, %s25
        %s269 = smul.u32 32, %s26
        %s270 = smul.u32 2, %s25
        %s271 = smul.u32 2, %s25
        %p272 = scmp.lt.s32.totalorder %s271, 3
        %s273 = scalar_select %p272, %s271, 3
        %s274 = scalar_lea.vmem %s3, %s273
        %s275 = smul.u32 2, %s25
        %s276 = smul.u32 2, %s25
        %p277 = scmp.eq.s32.totalorder %s26, 0
        // Predicated region
        $region41: #{tpu_custom_call.1} parent=35 // pred_check
          %p278 = pneg %p277
        $region42: #{tpu_custom_call.1} parent=35 // pred_check_branch
          %280 = sbr.rel (%p278) target = $region44
        $region43: #{tpu_custom_call.1} parent=35 // pred_region
          %281 = vst [vmem:[#allocation2] sm:$0xff] 0.0
          %282 = vst [vmem:[#allocation2 + $0x8] sm:$0xff] 0.0
          %283 = vst [vmem:[#allocation2 + $0x10] sm:$0xff] 0.0
          %284 = vst [vmem:[#allocation2 + $0x18] sm:$0xff] 0.0
          %285 = vst [vmem:[#allocation2 + $0x20] sm:$0xff] 0.0
          %286 = vst [vmem:[#allocation2 + $0x28] sm:$0xff] 0.0
          %287 = vst [vmem:[#allocation2 + $0x30] sm:$0xff] 0.0
          %288 = vst [vmem:[#allocation2 + $0x38] sm:$0xff] 0.0
          %289 = vst [vmem:[#allocation3] sm:$0xff] 0.0
          %290 = vst [vmem:[#allocation3 + $0x8] sm:$0xff] 0.0
        $region44: #{tpu_custom_call.1} parent=35 // pred_fallthru
          _
        %v291 = vld [vmem:[%s229] sm:$0xff]
        %v292 = vld [vmem:[%s229 + $0x8] sm:$0xff]
        %v293 = vld [vmem:[%s229 + $0x10] sm:$0xff]
        %v294 = vld [vmem:[%s229 + $0x18] sm:$0xff]
        %v295 = vld [vmem:[%s229 + $0x20] sm:$0xff]
        %v296 = vld [vmem:[%s229 + $0x28] sm:$0xff]
        %v297 = vld [vmem:[%s229 + $0x30] sm:$0xff]
        %v298 = vld [vmem:[%s229 + $0x38] sm:$0xff]
        %v299 = vld [vmem:[%s229 + $0x40] sm:$0xff]
        %v300 = vld [vmem:[%s229 + $0x48] sm:$0xff]
        %v301 = vld [vmem:[%s229 + $0x50] sm:$0xff]
        %v302 = vld [vmem:[%s229 + $0x58] sm:$0xff]
        %v303 = vld [vmem:[%s229 + $0x60] sm:$0xff]
        %v304 = vld [vmem:[%s229 + $0x68] sm:$0xff]
        %v305 = vld [vmem:[%s229 + $0x70] sm:$0xff]
        %v306 = vld [vmem:[%s229 + $0x78] sm:$0xff]
        %v307 = vld [vmem:[%s229 + $0x80] sm:$0xff]
        %v308 = vld [vmem:[%s229 + $0x88] sm:$0xff]
        %v309 = vld [vmem:[%s229 + $0x90] sm:$0xff]
        %v310 = vld [vmem:[%s229 + $0x98] sm:$0xff]
        %v311 = vld [vmem:[%s229 + $0xa0] sm:$0xff]
        %v312 = vld [vmem:[%s229 + $0xa8] sm:$0xff]
        %v313 = vld [vmem:[%s229 + $0xb0] sm:$0xff]
        %v314 = vld [vmem:[%s229 + $0xb8] sm:$0xff]
        %v315 = vld [vmem:[%s229 + $0xc0] sm:$0xff]
        %v316 = vld [vmem:[%s229 + $0xc8] sm:$0xff]
        %v317 = vld [vmem:[%s229 + $0xd0] sm:$0xff]
        %v318 = vld [vmem:[%s229 + $0xd8] sm:$0xff]
        %v319 = vld [vmem:[%s229 + $0xe0] sm:$0xff]
        %v320 = vld [vmem:[%s229 + $0xe8] sm:$0xff]
        %v321 = vld [vmem:[%s229 + $0xf0] sm:$0xff]
        %v322 = vld [vmem:[%s229 + $0xf8] sm:$0xff]
        %v323 = vld [vmem:[%s229 + $0x100] sm:$0xff]
        %v324 = vld [vmem:[%s229 + $0x108] sm:$0xff]
        %v325 = vld [vmem:[%s229 + $0x110] sm:$0xff]
        %v326 = vld [vmem:[%s229 + $0x118] sm:$0xff]
        %v327 = vld [vmem:[%s229 + $0x120] sm:$0xff]
        %v328 = vld [vmem:[%s229 + $0x128] sm:$0xff]
        %v329 = vld [vmem:[%s229 + $0x130] sm:$0xff]
        %v330 = vld [vmem:[%s229 + $0x138] sm:$0xff]
        %v331 = vld [vmem:[%s229 + $0x140] sm:$0xff]
        %v332 = vld [vmem:[%s229 + $0x148] sm:$0xff]
        %v333 = vld [vmem:[%s229 + $0x150] sm:$0xff]
        %v334 = vld [vmem:[%s229 + $0x158] sm:$0xff]
        %v335 = vld [vmem:[%s229 + $0x160] sm:$0xff]
        %v336 = vld [vmem:[%s229 + $0x168] sm:$0xff]
        %v337 = vld [vmem:[%s229 + $0x170] sm:$0xff]
        %v338 = vld [vmem:[%s229 + $0x178] sm:$0xff]
        %v339 = vld [vmem:[%s229 + $0x180] sm:$0xff]
        %v340 = vld [vmem:[%s229 + $0x188] sm:$0xff]
        %v341 = vld [vmem:[%s229 + $0x190] sm:$0xff]
        %v342 = vld [vmem:[%s229 + $0x198] sm:$0xff]
        %v343 = vld [vmem:[%s229 + $0x1a0] sm:$0xff]
        %v344 = vld [vmem:[%s229 + $0x1a8] sm:$0xff]
        %v345 = vld [vmem:[%s229 + $0x1b0] sm:$0xff]
        %v346 = vld [vmem:[%s229 + $0x1b8] sm:$0xff]
        %v347 = vld [vmem:[%s229 + $0x1c0] sm:$0xff]
        %v348 = vld [vmem:[%s229 + $0x1c8] sm:$0xff]
        %v349 = vld [vmem:[%s229 + $0x1d0] sm:$0xff]
        %v350 = vld [vmem:[%s229 + $0x1d8] sm:$0xff]
        %v351 = vld [vmem:[%s229 + $0x1e0] sm:$0xff]
        %v352 = vld [vmem:[%s229 + $0x1e8] sm:$0xff]
        %v353 = vld [vmem:[%s229 + $0x1f0] sm:$0xff]
        %v354 = vld [vmem:[%s229 + $0x1f8] sm:$0xff]
        %v355 = vrsqrt.pop %v291
        %v356 = vmul.f32 %v291, %v355
        %vm357 = vcmp.eq.f32.partialorder %v291, inf
        %v358 = vsel %vm357, %v291, %v356
        %vm359 = vcmp.eq.f32.partialorder %v291, 0.0
        %v360 = vand.u32 %v291, 2147483648
        %v361 = vsel %vm359, %v360, %v358
        %v362 = vrsqrt.pop %v292
        %v363 = vmul.f32 %v292, %v362
        %vm364 = vcmp.eq.f32.partialorder %v292, inf
        %v365 = vsel %vm364, %v292, %v363
        %vm366 = vcmp.eq.f32.partialorder %v292, 0.0
        %v367 = vand.u32 %v292, 2147483648
        %v368 = vsel %vm366, %v367, %v365
        %v369 = vrsqrt.pop %v293
        %v370 = vmul.f32 %v293, %v369
        %vm371 = vcmp.eq.f32.partialorder %v293, inf
        %v372 = vsel %vm371, %v293, %v370
        %vm373 = vcmp.eq.f32.partialorder %v293, 0.0
        %v374 = vand.u32 %v293, 2147483648
        %v375 = vsel %vm373, %v374, %v372
        %v376 = vrsqrt.pop %v294
        %v377 = vmul.f32 %v294, %v376
        %vm378 = vcmp.eq.f32.partialorder %v294, inf
        %v379 = vsel %vm378, %v294, %v377
        %vm380 = vcmp.eq.f32.partialorder %v294, 0.0
        %v381 = vand.u32 %v294, 2147483648
        %v382 = vsel %vm380, %v381, %v379
        %v383 = vrsqrt.pop %v295
        %v384 = vmul.f32 %v295, %v383
        %vm385 = vcmp.eq.f32.partialorder %v295, inf
        %v386 = vsel %vm385, %v295, %v384
        %vm387 = vcmp.eq.f32.partialorder %v295, 0.0
        %v388 = vand.u32 %v295, 2147483648
        %v389 = vsel %vm387, %v388, %v386
        %v390 = vrsqrt.pop %v296
        %v391 = vmul.f32 %v296, %v390
        %vm392 = vcmp.eq.f32.partialorder %v296, inf
        %v393 = vsel %vm392, %v296, %v391
        %vm394 = vcmp.eq.f32.partialorder %v296, 0.0
        %v395 = vand.u32 %v296, 2147483648
        %v396 = vsel %vm394, %v395, %v393
        %v397 = vrsqrt.pop %v297
        %v398 = vmul.f32 %v297, %v397
        %vm399 = vcmp.eq.f32.partialorder %v297, inf
        %v400 = vsel %vm399, %v297, %v398
        %vm401 = vcmp.eq.f32.partialorder %v297, 0.0
        %v402 = vand.u32 %v297, 2147483648
        %v403 = vsel %vm401, %v402, %v400
        %v404 = vrsqrt.pop %v298
        %v405 = vmul.f32 %v298, %v404
        %vm406 = vcmp.eq.f32.partialorder %v298, inf
        %v407 = vsel %vm406, %v298, %v405
        %vm408 = vcmp.eq.f32.partialorder %v298, 0.0
        %v409 = vand.u32 %v298, 2147483648
        %v410 = vsel %vm408, %v409, %v407
        %v411 = vrsqrt.pop %v299
        %v412 = vmul.f32 %v299, %v411
        %vm413 = vcmp.eq.f32.partialorder %v299, inf
        %v414 = vsel %vm413, %v299, %v412
        %vm415 = vcmp.eq.f32.partialorder %v299, 0.0
        %v416 = vand.u32 %v299, 2147483648
        %v417 = vsel %vm415, %v416, %v414
        %v418 = vrsqrt.pop %v300
        %v419 = vmul.f32 %v300, %v418
        %vm420 = vcmp.eq.f32.partialorder %v300, inf
        %v421 = vsel %vm420, %v300, %v419
        %vm422 = vcmp.eq.f32.partialorder %v300, 0.0
        %v423 = vand.u32 %v300, 2147483648
        %v424 = vsel %vm422, %v423, %v421
        %v425 = vrsqrt.pop %v301
        %v426 = vmul.f32 %v301, %v425
        %vm427 = vcmp.eq.f32.partialorder %v301, inf
        %v428 = vsel %vm427, %v301, %v426
        %vm429 = vcmp.eq.f32.partialorder %v301, 0.0
        %v430 = vand.u32 %v301, 2147483648
        %v431 = vsel %vm429, %v430, %v428
        %v432 = vrsqrt.pop %v302
        %v433 = vmul.f32 %v302, %v432
        %vm434 = vcmp.eq.f32.partialorder %v302, inf
        %v435 = vsel %vm434, %v302, %v433
        %vm436 = vcmp.eq.f32.partialorder %v302, 0.0
        %v437 = vand.u32 %v302, 2147483648
        %v438 = vsel %vm436, %v437, %v435
        %v439 = vrsqrt.pop %v303
        %v440 = vmul.f32 %v303, %v439
        %vm441 = vcmp.eq.f32.partialorder %v303, inf
        %v442 = vsel %vm441, %v303, %v440
        %vm443 = vcmp.eq.f32.partialorder %v303, 0.0
        %v444 = vand.u32 %v303, 2147483648
        %v445 = vsel %vm443, %v444, %v442
        %v446 = vrsqrt.pop %v304
        %v447 = vmul.f32 %v304, %v446
        %vm448 = vcmp.eq.f32.partialorder %v304, inf
        %v449 = vsel %vm448, %v304, %v447
        %vm450 = vcmp.eq.f32.partialorder %v304, 0.0
        %v451 = vand.u32 %v304, 2147483648
        %v452 = vsel %vm450, %v451, %v449
        %v453 = vrsqrt.pop %v305
        %v454 = vmul.f32 %v305, %v453
        %vm455 = vcmp.eq.f32.partialorder %v305, inf
        %v456 = vsel %vm455, %v305, %v454
        %vm457 = vcmp.eq.f32.partialorder %v305, 0.0
        %v458 = vand.u32 %v305, 2147483648
        %v459 = vsel %vm457, %v458, %v456
        %v460 = vrsqrt.pop %v306
        %v461 = vmul.f32 %v306, %v460
        %vm462 = vcmp.eq.f32.partialorder %v306, inf
        %v463 = vsel %vm462, %v306, %v461
        %vm464 = vcmp.eq.f32.partialorder %v306, 0.0
        %v465 = vand.u32 %v306, 2147483648
        %v466 = vsel %vm464, %v465, %v463
        %v467 = vrsqrt.pop %v307
        %v468 = vmul.f32 %v307, %v467
        %vm469 = vcmp.eq.f32.partialorder %v307, inf
        %v470 = vsel %vm469, %v307, %v468
        %vm471 = vcmp.eq.f32.partialorder %v307, 0.0
        %v472 = vand.u32 %v307, 2147483648
        %v473 = vsel %vm471, %v472, %v470
        %v474 = vrsqrt.pop %v308
        %v475 = vmul.f32 %v308, %v474
        %vm476 = vcmp.eq.f32.partialorder %v308, inf
        %v477 = vsel %vm476, %v308, %v475
        %vm478 = vcmp.eq.f32.partialorder %v308, 0.0
        %v479 = vand.u32 %v308, 2147483648
        %v480 = vsel %vm478, %v479, %v477
        %v481 = vrsqrt.pop %v309
        %v482 = vmul.f32 %v309, %v481
        %vm483 = vcmp.eq.f32.partialorder %v309, inf
        %v484 = vsel %vm483, %v309, %v482
        %vm485 = vcmp.eq.f32.partialorder %v309, 0.0
        %v486 = vand.u32 %v309, 2147483648
        %v487 = vsel %vm485, %v486, %v484
        %v488 = vrsqrt.pop %v310
        %v489 = vmul.f32 %v310, %v488
        %vm490 = vcmp.eq.f32.partialorder %v310, inf
        %v491 = vsel %vm490, %v310, %v489
        %vm492 = vcmp.eq.f32.partialorder %v310, 0.0
        %v493 = vand.u32 %v310, 2147483648
        %v494 = vsel %vm492, %v493, %v491
        %v495 = vrsqrt.pop %v311
        %v496 = vmul.f32 %v311, %v495
        %vm497 = vcmp.eq.f32.partialorder %v311, inf
        %v498 = vsel %vm497, %v311, %v496
        %vm499 = vcmp.eq.f32.partialorder %v311, 0.0
        %v500 = vand.u32 %v311, 2147483648
        %v501 = vsel %vm499, %v500, %v498
        %v502 = vrsqrt.pop %v312
        %v503 = vmul.f32 %v312, %v502
        %vm504 = vcmp.eq.f32.partialorder %v312, inf
        %v505 = vsel %vm504, %v312, %v503
        %vm506 = vcmp.eq.f32.partialorder %v312, 0.0
        %v507 = vand.u32 %v312, 2147483648
        %v508 = vsel %vm506, %v507, %v505
        %v509 = vrsqrt.pop %v313
        %v510 = vmul.f32 %v313, %v509
        %vm511 = vcmp.eq.f32.partialorder %v313, inf
        %v512 = vsel %vm511, %v313, %v510
        %vm513 = vcmp.eq.f32.partialorder %v313, 0.0
        %v514 = vand.u32 %v313, 2147483648
        %v515 = vsel %vm513, %v514, %v512
        %v516 = vrsqrt.pop %v314
        %v517 = vmul.f32 %v314, %v516
        %vm518 = vcmp.eq.f32.partialorder %v314, inf
        %v519 = vsel %vm518, %v314, %v517
        %vm520 = vcmp.eq.f32.partialorder %v314, 0.0
        %v521 = vand.u32 %v314, 2147483648
        %v522 = vsel %vm520, %v521, %v519
        %v523 = vrsqrt.pop %v315
        %v524 = vmul.f32 %v315, %v523
        %vm525 = vcmp.eq.f32.partialorder %v315, inf
        %v526 = vsel %vm525, %v315, %v524
        %vm527 = vcmp.eq.f32.partialorder %v315, 0.0
        %v528 = vand.u32 %v315, 2147483648
        %v529 = vsel %vm527, %v528, %v526
        %v530 = vrsqrt.pop %v316
        %v531 = vmul.f32 %v316, %v530
        %vm532 = vcmp.eq.f32.partialorder %v316, inf
        %v533 = vsel %vm532, %v316, %v531
        %vm534 = vcmp.eq.f32.partialorder %v316, 0.0
        %v535 = vand.u32 %v316, 2147483648
        %v536 = vsel %vm534, %v535, %v533
        %v537 = vrsqrt.pop %v317
        %v538 = vmul.f32 %v317, %v537
        %vm539 = vcmp.eq.f32.partialorder %v317, inf
        %v540 = vsel %vm539, %v317, %v538
        %vm541 = vcmp.eq.f32.partialorder %v317, 0.0
        %v542 = vand.u32 %v317, 2147483648
        %v543 = vsel %vm541, %v542, %v540
        %v544 = vrsqrt.pop %v318
        %v545 = vmul.f32 %v318, %v544
        %vm546 = vcmp.eq.f32.partialorder %v318, inf
        %v547 = vsel %vm546, %v318, %v545
        %vm548 = vcmp.eq.f32.partialorder %v318, 0.0
        %v549 = vand.u32 %v318, 2147483648
        %v550 = vsel %vm548, %v549, %v547
        %v551 = vrsqrt.pop %v319
        %v552 = vmul.f32 %v319, %v551
        %vm553 = vcmp.eq.f32.partialorder %v319, inf
        %v554 = vsel %vm553, %v319, %v552
        %vm555 = vcmp.eq.f32.partialorder %v319, 0.0
        %v556 = vand.u32 %v319, 2147483648
        %v557 = vsel %vm555, %v556, %v554
        %v558 = vrsqrt.pop %v320
        %v559 = vmul.f32 %v320, %v558
        %vm560 = vcmp.eq.f32.partialorder %v320, inf
        %v561 = vsel %vm560, %v320, %v559
        %vm562 = vcmp.eq.f32.partialorder %v320, 0.0
        %v563 = vand.u32 %v320, 2147483648
        %v564 = vsel %vm562, %v563, %v561
        %v565 = vrsqrt.pop %v321
        %v566 = vmul.f32 %v321, %v565
        %vm567 = vcmp.eq.f32.partialorder %v321, inf
        %v568 = vsel %vm567, %v321, %v566
        %vm569 = vcmp.eq.f32.partialorder %v321, 0.0
        %v570 = vand.u32 %v321, 2147483648
        %v571 = vsel %vm569, %v570, %v568
        %v572 = vrsqrt.pop %v322
        %v573 = vmul.f32 %v322, %v572
        %vm574 = vcmp.eq.f32.partialorder %v322, inf
        %v575 = vsel %vm574, %v322, %v573
        %vm576 = vcmp.eq.f32.partialorder %v322, 0.0
        %v577 = vand.u32 %v322, 2147483648
        %v578 = vsel %vm576, %v577, %v575
        %v579 = vrsqrt.pop %v323
        %v580 = vmul.f32 %v323, %v579
        %vm581 = vcmp.eq.f32.partialorder %v323, inf
        %v582 = vsel %vm581, %v323, %v580
        %vm583 = vcmp.eq.f32.partialorder %v323, 0.0
        %v584 = vand.u32 %v323, 2147483648
        %v585 = vsel %vm583, %v584, %v582
        %v586 = vrsqrt.pop %v324
        %v587 = vmul.f32 %v324, %v586
        %vm588 = vcmp.eq.f32.partialorder %v324, inf
        %v589 = vsel %vm588, %v324, %v587
        %vm590 = vcmp.eq.f32.partialorder %v324, 0.0
        %v591 = vand.u32 %v324, 2147483648
        %v592 = vsel %vm590, %v591, %v589
        %v593 = vrsqrt.pop %v325
        %v594 = vmul.f32 %v325, %v593
        %vm595 = vcmp.eq.f32.partialorder %v325, inf
        %v596 = vsel %vm595, %v325, %v594
        %vm597 = vcmp.eq.f32.partialorder %v325, 0.0
        %v598 = vand.u32 %v325, 2147483648
        %v599 = vsel %vm597, %v598, %v596
        %v600 = vrsqrt.pop %v326
        %v601 = vmul.f32 %v326, %v600
        %vm602 = vcmp.eq.f32.partialorder %v326, inf
        %v603 = vsel %vm602, %v326, %v601
        %vm604 = vcmp.eq.f32.partialorder %v326, 0.0
        %v605 = vand.u32 %v326, 2147483648
        %v606 = vsel %vm604, %v605, %v603
        %v607 = vrsqrt.pop %v327
        %v608 = vmul.f32 %v327, %v607
        %vm609 = vcmp.eq.f32.partialorder %v327, inf
        %v610 = vsel %vm609, %v327, %v608
        %vm611 = vcmp.eq.f32.partialorder %v327, 0.0
        %v612 = vand.u32 %v327, 2147483648
        %v613 = vsel %vm611, %v612, %v610
        %v614 = vrsqrt.pop %v328
        %v615 = vmul.f32 %v328, %v614
        %vm616 = vcmp.eq.f32.partialorder %v328, inf
        %v617 = vsel %vm616, %v328, %v615
        %vm618 = vcmp.eq.f32.partialorder %v328, 0.0
        %v619 = vand.u32 %v328, 2147483648
        %v620 = vsel %vm618, %v619, %v617
        %v621 = vrsqrt.pop %v329
        %v622 = vmul.f32 %v329, %v621
        %vm623 = vcmp.eq.f32.partialorder %v329, inf
        %v624 = vsel %vm623, %v329, %v622
        %vm625 = vcmp.eq.f32.partialorder %v329, 0.0
        %v626 = vand.u32 %v329, 2147483648
        %v627 = vsel %vm625, %v626, %v624
        %v628 = vrsqrt.pop %v330
        %v629 = vmul.f32 %v330, %v628
        %vm630 = vcmp.eq.f32.partialorder %v330, inf
        %v631 = vsel %vm630, %v330, %v629
        %vm632 = vcmp.eq.f32.partialorder %v330, 0.0
        %v633 = vand.u32 %v330, 2147483648
        %v634 = vsel %vm632, %v633, %v631
        %v635 = vrsqrt.pop %v331
        %v636 = vmul.f32 %v331, %v635
        %vm637 = vcmp.eq.f32.partialorder %v331, inf
        %v638 = vsel %vm637, %v331, %v636
        %vm639 = vcmp.eq.f32.partialorder %v331, 0.0
        %v640 = vand.u32 %v331, 2147483648
        %v641 = vsel %vm639, %v640, %v638
        %v642 = vrsqrt.pop %v332
        %v643 = vmul.f32 %v332, %v642
        %vm644 = vcmp.eq.f32.partialorder %v332, inf
        %v645 = vsel %vm644, %v332, %v643
        %vm646 = vcmp.eq.f32.partialorder %v332, 0.0
        %v647 = vand.u32 %v332, 2147483648
        %v648 = vsel %vm646, %v647, %v645
        %v649 = vrsqrt.pop %v333
        %v650 = vmul.f32 %v333, %v649
        %vm651 = vcmp.eq.f32.partialorder %v333, inf
        %v652 = vsel %vm651, %v333, %v650
        %vm653 = vcmp.eq.f32.partialorder %v333, 0.0
        %v654 = vand.u32 %v333, 2147483648
        %v655 = vsel %vm653, %v654, %v652
        %v656 = vrsqrt.pop %v334
        %v657 = vmul.f32 %v334, %v656
        %vm658 = vcmp.eq.f32.partialorder %v334, inf
        %v659 = vsel %vm658, %v334, %v657
        %vm660 = vcmp.eq.f32.partialorder %v334, 0.0
        %v661 = vand.u32 %v334, 2147483648
        %v662 = vsel %vm660, %v661, %v659
        %v663 = vrsqrt.pop %v335
        %v664 = vmul.f32 %v335, %v663
        %vm665 = vcmp.eq.f32.partialorder %v335, inf
        %v666 = vsel %vm665, %v335, %v664
        %vm667 = vcmp.eq.f32.partialorder %v335, 0.0
        %v668 = vand.u32 %v335, 2147483648
        %v669 = vsel %vm667, %v668, %v666
        %v670 = vrsqrt.pop %v336
        %v671 = vmul.f32 %v336, %v670
        %vm672 = vcmp.eq.f32.partialorder %v336, inf
        %v673 = vsel %vm672, %v336, %v671
        %vm674 = vcmp.eq.f32.partialorder %v336, 0.0
        %v675 = vand.u32 %v336, 2147483648
        %v676 = vsel %vm674, %v675, %v673
        %v677 = vrsqrt.pop %v337
        %v678 = vmul.f32 %v337, %v677
        %vm679 = vcmp.eq.f32.partialorder %v337, inf
        %v680 = vsel %vm679, %v337, %v678
        %vm681 = vcmp.eq.f32.partialorder %v337, 0.0
        %v682 = vand.u32 %v337, 2147483648
        %v683 = vsel %vm681, %v682, %v680
        %v684 = vrsqrt.pop %v338
        %v685 = vmul.f32 %v338, %v684
        %vm686 = vcmp.eq.f32.partialorder %v338, inf
        %v687 = vsel %vm686, %v338, %v685
        %vm688 = vcmp.eq.f32.partialorder %v338, 0.0
        %v689 = vand.u32 %v338, 2147483648
        %v690 = vsel %vm688, %v689, %v687
        %v691 = vrsqrt.pop %v339
        %v692 = vmul.f32 %v339, %v691
        %vm693 = vcmp.eq.f32.partialorder %v339, inf
        %v694 = vsel %vm693, %v339, %v692
        %vm695 = vcmp.eq.f32.partialorder %v339, 0.0
        %v696 = vand.u32 %v339, 2147483648
        %v697 = vsel %vm695, %v696, %v694
        %v698 = vrsqrt.pop %v340
        %v699 = vmul.f32 %v340, %v698
        %vm700 = vcmp.eq.f32.partialorder %v340, inf
        %v701 = vsel %vm700, %v340, %v699
        %vm702 = vcmp.eq.f32.partialorder %v340, 0.0
        %v703 = vand.u32 %v340, 2147483648
        %v704 = vsel %vm702, %v703, %v701
        %v705 = vrsqrt.pop %v341
        %v706 = vmul.f32 %v341, %v705
        %vm707 = vcmp.eq.f32.partialorder %v341, inf
        %v708 = vsel %vm707, %v341, %v706
        %vm709 = vcmp.eq.f32.partialorder %v341, 0.0
        %v710 = vand.u32 %v341, 2147483648
        %v711 = vsel %vm709, %v710, %v708
        %v712 = vrsqrt.pop %v342
        %v713 = vmul.f32 %v342, %v712
        %vm714 = vcmp.eq.f32.partialorder %v342, inf
        %v715 = vsel %vm714, %v342, %v713
        %vm716 = vcmp.eq.f32.partialorder %v342, 0.0
        %v717 = vand.u32 %v342, 2147483648
        %v718 = vsel %vm716, %v717, %v715
        %v719 = vrsqrt.pop %v343
        %v720 = vmul.f32 %v343, %v719
        %vm721 = vcmp.eq.f32.partialorder %v343, inf
        %v722 = vsel %vm721, %v343, %v720
        %vm723 = vcmp.eq.f32.partialorder %v343, 0.0
        %v724 = vand.u32 %v343, 2147483648
        %v725 = vsel %vm723, %v724, %v722
        %v726 = vrsqrt.pop %v344
        %v727 = vmul.f32 %v344, %v726
        %vm728 = vcmp.eq.f32.partialorder %v344, inf
        %v729 = vsel %vm728, %v344, %v727
        %vm730 = vcmp.eq.f32.partialorder %v344, 0.0
        %v731 = vand.u32 %v344, 2147483648
        %v732 = vsel %vm730, %v731, %v729
        %v733 = vrsqrt.pop %v345
        %v734 = vmul.f32 %v345, %v733
        %vm735 = vcmp.eq.f32.partialorder %v345, inf
        %v736 = vsel %vm735, %v345, %v734
        %vm737 = vcmp.eq.f32.partialorder %v345, 0.0
        %v738 = vand.u32 %v345, 2147483648
        %v739 = vsel %vm737, %v738, %v736
        %v740 = vrsqrt.pop %v346
        %v741 = vmul.f32 %v346, %v740
        %vm742 = vcmp.eq.f32.partialorder %v346, inf
        %v743 = vsel %vm742, %v346, %v741
        %vm744 = vcmp.eq.f32.partialorder %v346, 0.0
        %v745 = vand.u32 %v346, 2147483648
        %v746 = vsel %vm744, %v745, %v743
        %v747 = vrsqrt.pop %v347
        %v748 = vmul.f32 %v347, %v747
        %vm749 = vcmp.eq.f32.partialorder %v347, inf
        %v750 = vsel %vm749, %v347, %v748
        %vm751 = vcmp.eq.f32.partialorder %v347, 0.0
        %v752 = vand.u32 %v347, 2147483648
        %v753 = vsel %vm751, %v752, %v750
        %v754 = vrsqrt.pop %v348
        %v755 = vmul.f32 %v348, %v754
        %vm756 = vcmp.eq.f32.partialorder %v348, inf
        %v757 = vsel %vm756, %v348, %v755
        %vm758 = vcmp.eq.f32.partialorder %v348, 0.0
        %v759 = vand.u32 %v348, 2147483648
        %v760 = vsel %vm758, %v759, %v757
        %v761 = vrsqrt.pop %v349
        %v762 = vmul.f32 %v349, %v761
        %vm763 = vcmp.eq.f32.partialorder %v349, inf
        %v764 = vsel %vm763, %v349, %v762
        %vm765 = vcmp.eq.f32.partialorder %v349, 0.0
        %v766 = vand.u32 %v349, 2147483648
        %v767 = vsel %vm765, %v766, %v764
        %v768 = vrsqrt.pop %v350
        %v769 = vmul.f32 %v350, %v768
        %vm770 = vcmp.eq.f32.partialorder %v350, inf
        %v771 = vsel %vm770, %v350, %v769
        %vm772 = vcmp.eq.f32.partialorder %v350, 0.0
        %v773 = vand.u32 %v350, 2147483648
        %v774 = vsel %vm772, %v773, %v771
        %v775 = vrsqrt.pop %v351
        %v776 = vmul.f32 %v351, %v775
        %vm777 = vcmp.eq.f32.partialorder %v351, inf
        %v778 = vsel %vm777, %v351, %v776
        %vm779 = vcmp.eq.f32.partialorder %v351, 0.0
        %v780 = vand.u32 %v351, 2147483648
        %v781 = vsel %vm779, %v780, %v778
        %v782 = vrsqrt.pop %v352
        %v783 = vmul.f32 %v352, %v782
        %vm784 = vcmp.eq.f32.partialorder %v352, inf
        %v785 = vsel %vm784, %v352, %v783
        %vm786 = vcmp.eq.f32.partialorder %v352, 0.0
        %v787 = vand.u32 %v352, 2147483648
        %v788 = vsel %vm786, %v787, %v785
        %v789 = vrsqrt.pop %v353
        %v790 = vmul.f32 %v353, %v789
        %vm791 = vcmp.eq.f32.partialorder %v353, inf
        %v792 = vsel %vm791, %v353, %v790
        %vm793 = vcmp.eq.f32.partialorder %v353, 0.0
        %v794 = vand.u32 %v353, 2147483648
        %v795 = vsel %vm793, %v794, %v792
        %v796 = vrsqrt.pop %v354
        %v797 = vmul.f32 %v354, %v796
        %vm798 = vcmp.eq.f32.partialorder %v354, inf
        %v799 = vsel %vm798, %v354, %v797
        %vm800 = vcmp.eq.f32.partialorder %v354, 0.0
        %v801 = vand.u32 %v354, 2147483648
        %v802 = vsel %vm800, %v801, %v799
        %v803 = vld [vmem:[#allocation3] sm:$0xff]
        %v804 = vld [vmem:[#allocation3 + $0x8] sm:$0xff]
        %v805 = vadd.f32 %v291, %v293
        %v806 = vadd.f32 %v805, %v295
        %v807 = vadd.f32 %v806, %v297
        %v808 = vadd.f32 %v807, %v299
        %v809 = vadd.f32 %v808, %v301
        %v810 = vadd.f32 %v809, %v303
        %v811 = vadd.f32 %v810, %v305
        %v812 = vadd.f32 %v811, %v307
        %v813 = vadd.f32 %v812, %v309
        %v814 = vadd.f32 %v813, %v311
        %v815 = vadd.f32 %v814, %v313
        %v816 = vadd.f32 %v815, %v315
        %v817 = vadd.f32 %v816, %v317
        %v818 = vadd.f32 %v817, %v319
        %v819 = vadd.f32 %v818, %v321
        %v820 = vadd.f32 %v819, %v323
        %v821 = vadd.f32 %v820, %v325
        %v822 = vadd.f32 %v821, %v327
        %v823 = vadd.f32 %v822, %v329
        %v824 = vadd.f32 %v823, %v331
        %v825 = vadd.f32 %v824, %v333
        %v826 = vadd.f32 %v825, %v335
        %v827 = vadd.f32 %v826, %v337
        %v828 = vadd.f32 %v827, %v339
        %v829 = vadd.f32 %v828, %v341
        %v830 = vadd.f32 %v829, %v343
        %v831 = vadd.f32 %v830, %v345
        %v832 = vadd.f32 %v831, %v347
        %v833 = vadd.f32 %v832, %v349
        %v834 = vadd.f32 %v833, %v351
        %v835 = vadd.f32 %v834, %v353
        %v836 = vadd.f32 %v292, %v294
        %v837 = vadd.f32 %v836, %v296
        %v838 = vadd.f32 %v837, %v298
        %v839 = vadd.f32 %v838, %v300
        %v840 = vadd.f32 %v839, %v302
        %v841 = vadd.f32 %v840, %v304
        %v842 = vadd.f32 %v841, %v306
        %v843 = vadd.f32 %v842, %v308
        %v844 = vadd.f32 %v843, %v310
        %v845 = vadd.f32 %v844, %v312
        %v846 = vadd.f32 %v845, %v314
        %v847 = vadd.f32 %v846, %v316
        %v848 = vadd.f32 %v847, %v318
        %v849 = vadd.f32 %v848, %v320
        %v850 = vadd.f32 %v849, %v322
        %v851 = vadd.f32 %v850, %v324
        %v852 = vadd.f32 %v851, %v326
        %v853 = vadd.f32 %v852, %v328
        %v854 = vadd.f32 %v853, %v330
        %v855 = vadd.f32 %v854, %v332
        %v856 = vadd.f32 %v855, %v334
        %v857 = vadd.f32 %v856, %v336
        %v858 = vadd.f32 %v857, %v338
        %v859 = vadd.f32 %v858, %v340
        %v860 = vadd.f32 %v859, %v342
        %v861 = vadd.f32 %v860, %v344
        %v862 = vadd.f32 %v861, %v346
        %v863 = vadd.f32 %v862, %v348
        %v864 = vadd.f32 %v863, %v350
        %v865 = vadd.f32 %v864, %v352
        %v866 = vadd.f32 %v865, %v354
        %v867 = vadd.f32 %v803, %v835
        %v868 = vadd.f32 %v804, %v866
        %869 = vst [vmem:[#allocation3] sm:$0xff] %v867
        %870 = vst [vmem:[#allocation3 + $0x8] sm:$0xff] %v868
        %s871 = smul.u32 %s26, 256
        %s872 = scalar_lea.vmem %s1, %s871
        %v873 = vld [vmem:[%s872] sm:$0xff]
        %v874 = vld [vmem:[%s872 + $0x8] sm:$0xff]
        %v875 = vld [vmem:[%s872 + $0x10] sm:$0xff]
        %v876 = vld [vmem:[%s872 + $0x18] sm:$0xff]
        %v877 = vld [vmem:[%s872 + $0x20] sm:$0xff]
        %v878 = vld [vmem:[%s872 + $0x28] sm:$0xff]
        %v879 = vld [vmem:[%s872 + $0x30] sm:$0xff]
        %v880 = vld [vmem:[%s872 + $0x38] sm:$0xff]
        %v881 = vld [vmem:[%s872 + $0x40] sm:$0xff]
        %v882 = vld [vmem:[%s872 + $0x48] sm:$0xff]
        %v883 = vld [vmem:[%s872 + $0x50] sm:$0xff]
        %v884 = vld [vmem:[%s872 + $0x58] sm:$0xff]
        %v885 = vld [vmem:[%s872 + $0x60] sm:$0xff]
        %v886 = vld [vmem:[%s872 + $0x68] sm:$0xff]
        %v887 = vld [vmem:[%s872 + $0x70] sm:$0xff]
        %v888 = vld [vmem:[%s872 + $0x78] sm:$0xff]
        %v889 = vld [vmem:[%s872 + $0x80] sm:$0xff]
        %v890 = vld [vmem:[%s872 + $0x88] sm:$0xff]
        %v891 = vld [vmem:[%s872 + $0x90] sm:$0xff]
        %v892 = vld [vmem:[%s872 + $0x98] sm:$0xff]
        %v893 = vld [vmem:[%s872 + $0xa0] sm:$0xff]
        %v894 = vld [vmem:[%s872 + $0xa8] sm:$0xff]
        %v895 = vld [vmem:[%s872 + $0xb0] sm:$0xff]
        %v896 = vld [vmem:[%s872 + $0xb8] sm:$0xff]
        %v897 = vld [vmem:[%s872 + $0xc0] sm:$0xff]
        %v898 = vld [vmem:[%s872 + $0xc8] sm:$0xff]
        %v899 = vld [vmem:[%s872 + $0xd0] sm:$0xff]
        %v900 = vld [vmem:[%s872 + $0xd8] sm:$0xff]
        %v901 = vld [vmem:[%s872 + $0xe0] sm:$0xff]
        %v902 = vld [vmem:[%s872 + $0xe8] sm:$0xff]
        %v903 = vld [vmem:[%s872 + $0xf0] sm:$0xff]
        %v904 = vld [vmem:[%s872 + $0xf8] sm:$0xff]
        %v905 = vld [vmem:[%s267] ss:$4 sm:$0x3]
        %v907 = vlaneseq
        %v908 = vshrl.u32 %v907, 7
        %v909 = vsub.s32 0, %v908
        %v910 = vrot.slane %v905, %v909
        %v911 = vlaneseq
        %v912 = vshrl.u32 %v911, 7
        %v913 = vsub.s32 1, %v912
        %v914 = vrot.slane %v905, %v913
        %918 = vset.pattern.permute.xlu0 0
        %919 = vperm.xlu0 %918, %v873
        %v920 = vpop.permute.xlu0 %919
        %923 = vset.pattern.permute.xlu0 0
        %924 = vperm.xlu0 %923, %v874
        %v925 = vpop.permute.xlu0 %924
        %928 = vset.pattern.permute.xlu0 0
        %929 = vperm.xlu0 %928, %v875
        %v930 = vpop.permute.xlu0 %929
        %933 = vset.pattern.permute.xlu0 0
        %934 = vperm.xlu0 %933, %v876
        %v935 = vpop.permute.xlu0 %934
        %938 = vset.pattern.permute.xlu0 0
        %939 = vperm.xlu0 %938, %v877
        %v940 = vpop.permute.xlu0 %939
        %943 = vset.pattern.permute.xlu0 0
        %944 = vperm.xlu0 %943, %v878
        %v945 = vpop.permute.xlu0 %944
        %948 = vset.pattern.permute.xlu0 0
        %949 = vperm.xlu0 %948, %v879
        %v950 = vpop.permute.xlu0 %949
        %953 = vset.pattern.permute.xlu0 0
        %954 = vperm.xlu0 %953, %v880
        %v955 = vpop.permute.xlu0 %954
        %958 = vset.pattern.permute.xlu0 0
        %959 = vperm.xlu0 %958, %v881
        %v960 = vpop.permute.xlu0 %959
        %963 = vset.pattern.permute.xlu0 0
        %964 = vperm.xlu0 %963, %v882
        %v965 = vpop.permute.xlu0 %964
        %968 = vset.pattern.permute.xlu0 0
        %969 = vperm.xlu0 %968, %v883
        %v970 = vpop.permute.xlu0 %969
        %973 = vset.pattern.permute.xlu0 0
        %974 = vperm.xlu0 %973, %v884
        %v975 = vpop.permute.xlu0 %974
        %978 = vset.pattern.permute.xlu0 0
        %979 = vperm.xlu0 %978, %v885
        %v980 = vpop.permute.xlu0 %979
        %983 = vset.pattern.permute.xlu0 0
        %984 = vperm.xlu0 %983, %v886
        %v985 = vpop.permute.xlu0 %984
        %988 = vset.pattern.permute.xlu0 0
        %989 = vperm.xlu0 %988, %v887
        %v990 = vpop.permute.xlu0 %989
        %993 = vset.pattern.permute.xlu0 0
        %994 = vperm.xlu0 %993, %v888
        %v995 = vpop.permute.xlu0 %994
        %998 = vset.pattern.permute.xlu0 0
        %999 = vperm.xlu0 %998, %v889
        %v1000 = vpop.permute.xlu0 %999
        %1003 = vset.pattern.permute.xlu0 0
        %1004 = vperm.xlu0 %1003, %v890
        %v1005 = vpop.permute.xlu0 %1004
        %1008 = vset.pattern.permute.xlu0 0
        %1009 = vperm.xlu0 %1008, %v891
        %v1010 = vpop.permute.xlu0 %1009
        %1013 = vset.pattern.permute.xlu0 0
        %1014 = vperm.xlu0 %1013, %v892
        %v1015 = vpop.permute.xlu0 %1014
        %1018 = vset.pattern.permute.xlu0 0
        %1019 = vperm.xlu0 %1018, %v893
        %v1020 = vpop.permute.xlu0 %1019
        %1023 = vset.pattern.permute.xlu0 0
        %1024 = vperm.xlu0 %1023, %v894
        %v1025 = vpop.permute.xlu0 %1024
        %1028 = vset.pattern.permute.xlu0 0
        %1029 = vperm.xlu0 %1028, %v895
        %v1030 = vpop.permute.xlu0 %1029
        %1033 = vset.pattern.permute.xlu0 0
        %1034 = vperm.xlu0 %1033, %v896
        %v1035 = vpop.permute.xlu0 %1034
        %1038 = vset.pattern.permute.xlu0 0
        %1039 = vperm.xlu0 %1038, %v897
        %v1040 = vpop.permute.xlu0 %1039
        %1043 = vset.pattern.permute.xlu0 0
        %1044 = vperm.xlu0 %1043, %v898
        %v1045 = vpop.permute.xlu0 %1044
        %1048 = vset.pattern.permute.xlu0 0
        %1049 = vperm.xlu0 %1048, %v899
        %v1050 = vpop.permute.xlu0 %1049
        %1053 = vset.pattern.permute.xlu0 0
        %1054 = vperm.xlu0 %1053, %v900
        %v1055 = vpop.permute.xlu0 %1054
        %1058 = vset.pattern.permute.xlu0 0
        %1059 = vperm.xlu0 %1058, %v901
        %v1060 = vpop.permute.xlu0 %1059
        %1063 = vset.pattern.permute.xlu0 0
        %1064 = vperm.xlu0 %1063, %v902
        %v1065 = vpop.permute.xlu0 %1064
        %1068 = vset.pattern.permute.xlu0 0
        %1069 = vperm.xlu0 %1068, %v903
        %v1070 = vpop.permute.xlu0 %1069
        %1073 = vset.pattern.permute.xlu0 0
        %1074 = vperm.xlu0 %1073, %v904
        %v1075 = vpop.permute.xlu0 %1074
        %v1077 = vsub.f32 %v910, %v920
        %v1078 = vsub.f32 %v914, %v920
        %v1079 = vsub.f32 %v910, %v925
        %v1080 = vsub.f32 %v914, %v925
        %v1081 = vsub.f32 %v910, %v930
        %v1082 = vsub.f32 %v914, %v930
        %v1083 = vsub.f32 %v910, %v935
        %v1084 = vsub.f32 %v914, %v935
        %v1085 = vsub.f32 %v910, %v940
        %v1086 = vsub.f32 %v914, %v940
        %v1087 = vsub.f32 %v910, %v945
        %v1088 = vsub.f32 %v914, %v945
        %v1089 = vsub.f32 %v910, %v950
        %v1090 = vsub.f32 %v914, %v950
        %v1091 = vsub.f32 %v910, %v955
        %v1092 = vsub.f32 %v914, %v955
        %v1093 = vsub.f32 %v910, %v960
        %v1094 = vsub.f32 %v914, %v960
        %v1095 = vsub.f32 %v910, %v965
        %v1096 = vsub.f32 %v914, %v965
        %v1097 = vsub.f32 %v910, %v970
        %v1098 = vsub.f32 %v914, %v970
        %v1099 = vsub.f32 %v910, %v975
        %v1100 = vsub.f32 %v914, %v975
        %v1101 = vsub.f32 %v910, %v980
        %v1102 = vsub.f32 %v914, %v980
        %v1103 = vsub.f32 %v910, %v985
        %v1104 = vsub.f32 %v914, %v985
        %v1105 = vsub.f32 %v910, %v990
        %v1106 = vsub.f32 %v914, %v990
        %v1107 = vsub.f32 %v910, %v995
        %v1108 = vsub.f32 %v914, %v995
        %v1109 = vsub.f32 %v910, %v1000
        %v1110 = vsub.f32 %v914, %v1000
        %v1111 = vsub.f32 %v910, %v1005
        %v1112 = vsub.f32 %v914, %v1005
        %v1113 = vsub.f32 %v910, %v1010
        %v1114 = vsub.f32 %v914, %v1010
        %v1115 = vsub.f32 %v910, %v1015
        %v1116 = vsub.f32 %v914, %v1015
        %v1117 = vsub.f32 %v910, %v1020
        %v1118 = vsub.f32 %v914, %v1020
        %v1119 = vsub.f32 %v910, %v1025
        %v1120 = vsub.f32 %v914, %v1025
        %v1121 = vsub.f32 %v910, %v1030
        %v1122 = vsub.f32 %v914, %v1030
        %v1123 = vsub.f32 %v910, %v1035
        %v1124 = vsub.f32 %v914, %v1035
        %v1125 = vsub.f32 %v910, %v1040
        %v1126 = vsub.f32 %v914, %v1040
        %v1127 = vsub.f32 %v910, %v1045
        %v1128 = vsub.f32 %v914, %v1045
        %v1129 = vsub.f32 %v910, %v1050
        %v1130 = vsub.f32 %v914, %v1050
        %v1131 = vsub.f32 %v910, %v1055
        %v1132 = vsub.f32 %v914, %v1055
        %v1133 = vsub.f32 %v910, %v1060
        %v1134 = vsub.f32 %v914, %v1060
        %v1135 = vsub.f32 %v910, %v1065
        %v1136 = vsub.f32 %v914, %v1065
        %v1137 = vsub.f32 %v910, %v1070
        %v1138 = vsub.f32 %v914, %v1070
        %v1139 = vsub.f32 %v910, %v1075
        %v1140 = vsub.f32 %v914, %v1075
        %v1141 = vmul.f32 %v361, %v1077
        %v1142 = vmul.f32 %v368, %v1078
        %v1143 = vmul.f32 %v375, %v1079
        %v1144 = vmul.f32 %v382, %v1080
        %v1145 = vmul.f32 %v389, %v1081
        %v1146 = vmul.f32 %v396, %v1082
        %v1147 = vmul.f32 %v403, %v1083
        %v1148 = vmul.f32 %v410, %v1084
        %v1149 = vmul.f32 %v417, %v1085
        %v1150 = vmul.f32 %v424, %v1086
        %v1151 = vmul.f32 %v431, %v1087
        %v1152 = vmul.f32 %v438, %v1088
        %v1153 = vmul.f32 %v445, %v1089
        %v1154 = vmul.f32 %v452, %v1090
        %v1155 = vmul.f32 %v459, %v1091
        %v1156 = vmul.f32 %v466, %v1092
        %v1157 = vmul.f32 %v473, %v1093
        %v1158 = vmul.f32 %v480, %v1094
        %v1159 = vmul.f32 %v487, %v1095
        %v1160 = vmul.f32 %v494, %v1096
        %v1161 = vmul.f32 %v501, %v1097
        %v1162 = vmul.f32 %v508, %v1098
        %v1163 = vmul.f32 %v515, %v1099
        %v1164 = vmul.f32 %v522, %v1100
        %v1165 = vmul.f32 %v529, %v1101
        %v1166 = vmul.f32 %v536, %v1102
        %v1167 = vmul.f32 %v543, %v1103
        %v1168 = vmul.f32 %v550, %v1104
        %v1169 = vmul.f32 %v557, %v1105
        %v1170 = vmul.f32 %v564, %v1106
        %v1171 = vmul.f32 %v571, %v1107
        %v1172 = vmul.f32 %v578, %v1108
        %v1173 = vmul.f32 %v585, %v1109
        %v1174 = vmul.f32 %v592, %v1110
        %v1175 = vmul.f32 %v599, %v1111
        %v1176 = vmul.f32 %v606, %v1112
        %v1177 = vmul.f32 %v613, %v1113
        %v1178 = vmul.f32 %v620, %v1114
        %v1179 = vmul.f32 %v627, %v1115
        %v1180 = vmul.f32 %v634, %v1116
        %v1181 = vmul.f32 %v641, %v1117
        %v1182 = vmul.f32 %v648, %v1118
        %v1183 = vmul.f32 %v655, %v1119
        %v1184 = vmul.f32 %v662, %v1120
        %v1185 = vmul.f32 %v669, %v1121
        %v1186 = vmul.f32 %v676, %v1122
        %v1187 = vmul.f32 %v683, %v1123
        %v1188 = vmul.f32 %v690, %v1124
        %v1189 = vmul.f32 %v697, %v1125
        %v1190 = vmul.f32 %v704, %v1126
        %v1191 = vmul.f32 %v711, %v1127
        %v1192 = vmul.f32 %v718, %v1128
        %v1193 = vmul.f32 %v725, %v1129
        %v1194 = vmul.f32 %v732, %v1130
        %v1195 = vmul.f32 %v739, %v1131
        %v1196 = vmul.f32 %v746, %v1132
        %v1197 = vmul.f32 %v753, %v1133
        %v1198 = vmul.f32 %v760, %v1134
        %v1199 = vmul.f32 %v767, %v1135
        %v1200 = vmul.f32 %v774, %v1136
        %v1201 = vmul.f32 %v781, %v1137
        %v1202 = vmul.f32 %v788, %v1138
        %v1203 = vmul.f32 %v795, %v1139
        %v1204 = vmul.f32 %v802, %v1140
        %v1205 = vmax.f32 %v1141, %v1145
        %v1206 = vmax.f32 %v1143, %v1147
        %v1207 = vmax.f32 %v1205, %v1149
        %v1208 = vmax.f32 %v1206, %v1151
        %v1209 = vmax.f32 %v1207, %v1153
        %v1210 = vmax.f32 %v1208, %v1155
        %v1211 = vmax.f32 %v1209, %v1157
        %v1212 = vmax.f32 %v1210, %v1159
        %v1213 = vmax.f32 %v1211, %v1161
        %v1214 = vmax.f32 %v1212, %v1163
        %v1215 = vmax.f32 %v1213, %v1165
        %v1216 = vmax.f32 %v1214, %v1167
        %v1217 = vmax.f32 %v1215, %v1169
        %v1218 = vmax.f32 %v1216, %v1171
        %v1219 = vmax.f32 %v1217, %v1173
        %v1220 = vmax.f32 %v1218, %v1175
        %v1221 = vmax.f32 %v1219, %v1177
        %v1222 = vmax.f32 %v1220, %v1179
        %v1223 = vmax.f32 %v1221, %v1181
        %v1224 = vmax.f32 %v1222, %v1183
        %v1225 = vmax.f32 %v1223, %v1185
        %v1226 = vmax.f32 %v1224, %v1187
        %v1227 = vmax.f32 %v1225, %v1189
        %v1228 = vmax.f32 %v1226, %v1191
        %v1229 = vmax.f32 %v1227, %v1193
        %v1230 = vmax.f32 %v1228, %v1195
        %v1231 = vmax.f32 %v1229, %v1197
        %v1232 = vmax.f32 %v1230, %v1199
        %v1233 = vmax.f32 %v1231, %v1201
        %v1234 = vmax.f32 %v1232, %v1203
        %v1235 = vmax.f32 %v1233, %v1234
        %v1236 = vmax.f32 %v1142, %v1146
        %v1237 = vmax.f32 %v1144, %v1148
        %v1238 = vmax.f32 %v1236, %v1150
        %v1239 = vmax.f32 %v1237, %v1152
        %v1240 = vmax.f32 %v1238, %v1154
        %v1241 = vmax.f32 %v1239, %v1156
        %v1242 = vmax.f32 %v1240, %v1158
        %v1243 = vmax.f32 %v1241, %v1160
        %v1244 = vmax.f32 %v1242, %v1162
        %v1245 = vmax.f32 %v1243, %v1164
        %v1246 = vmax.f32 %v1244, %v1166
        %v1247 = vmax.f32 %v1245, %v1168
        %v1248 = vmax.f32 %v1246, %v1170
        %v1249 = vmax.f32 %v1247, %v1172
        %v1250 = vmax.f32 %v1248, %v1174
        %v1251 = vmax.f32 %v1249, %v1176
        %v1252 = vmax.f32 %v1250, %v1178
        %v1253 = vmax.f32 %v1251, %v1180
        %v1254 = vmax.f32 %v1252, %v1182
        %v1255 = vmax.f32 %v1253, %v1184
        %v1256 = vmax.f32 %v1254, %v1186
        %v1257 = vmax.f32 %v1255, %v1188
        %v1258 = vmax.f32 %v1256, %v1190
        %v1259 = vmax.f32 %v1257, %v1192
        %v1260 = vmax.f32 %v1258, %v1194
        %v1261 = vmax.f32 %v1259, %v1196
        %v1262 = vmax.f32 %v1260, %v1198
        %v1263 = vmax.f32 %v1261, %v1200
        %v1264 = vmax.f32 %v1262, %v1202
        %v1265 = vmax.f32 %v1263, %v1204
        %v1266 = vmax.f32 %v1264, %v1265
        %v1267 = vld [vmem:[#allocation2] sm:$0xff]
        %v1268 = vld [vmem:[#allocation2 + $0x8] sm:$0xff]
        %v1269 = vmax.f32 %v1267, %v1235
        %v1270 = vmax.f32 %v1268, %v1266
        %1271 = vst [vmem:[#allocation2] sm:$0xff] %v1269
        %1272 = vst [vmem:[#allocation2 + $0x8] sm:$0xff] %v1270
        %s1273 = scalar_lea.vmem %s267, 1
        %v1274 = vld [vmem:[%s1273] ss:$4 sm:$0x3]
        %v1276 = vlaneseq
        %v1277 = vshrl.u32 %v1276, 7
        %v1278 = vsub.s32 0, %v1277
        %v1279 = vrot.slane %v1274, %v1278
        %v1280 = vlaneseq
        %v1281 = vshrl.u32 %v1280, 7
        %v1282 = vsub.s32 1, %v1281
        %v1283 = vrot.slane %v1274, %v1282
        %1286 = vset.pattern.permute.xlu0 1
        %1287 = vperm.xlu0 %1286, %v873
        %v1288 = vpop.permute.xlu0 %1287
        %1290 = vset.pattern.permute.xlu0 1
        %1291 = vperm.xlu0 %1290, %v874
        %v1292 = vpop.permute.xlu0 %1291
        %1294 = vset.pattern.permute.xlu0 1
        %1295 = vperm.xlu0 %1294, %v875
        %v1296 = vpop.permute.xlu0 %1295
        %1298 = vset.pattern.permute.xlu0 1
        %1299 = vperm.xlu0 %1298, %v876
        %v1300 = vpop.permute.xlu0 %1299
        %1302 = vset.pattern.permute.xlu0 1
        %1303 = vperm.xlu0 %1302, %v877
        %v1304 = vpop.permute.xlu0 %1303
        %1306 = vset.pattern.permute.xlu0 1
        %1307 = vperm.xlu0 %1306, %v878
        %v1308 = vpop.permute.xlu0 %1307
        %1310 = vset.pattern.permute.xlu0 1
        %1311 = vperm.xlu0 %1310, %v879
        %v1312 = vpop.permute.xlu0 %1311
        %1314 = vset.pattern.permute.xlu0 1
        %1315 = vperm.xlu0 %1314, %v880
        %v1316 = vpop.permute.xlu0 %1315
        %1318 = vset.pattern.permute.xlu0 1
        %1319 = vperm.xlu0 %1318, %v881
        %v1320 = vpop.permute.xlu0 %1319
        %1322 = vset.pattern.permute.xlu0 1
        %1323 = vperm.xlu0 %1322, %v882
        %v1324 = vpop.permute.xlu0 %1323
        %1326 = vset.pattern.permute.xlu0 1
        %1327 = vperm.xlu0 %1326, %v883
        %v1328 = vpop.permute.xlu0 %1327
        %1330 = vset.pattern.permute.xlu0 1
        %1331 = vperm.xlu0 %1330, %v884
        %v1332 = vpop.permute.xlu0 %1331
        %1334 = vset.pattern.permute.xlu0 1
        %1335 = vperm.xlu0 %1334, %v885
        %v1336 = vpop.permute.xlu0 %1335
        %1338 = vset.pattern.permute.xlu0 1
        %1339 = vperm.xlu0 %1338, %v886
        %v1340 = vpop.permute.xlu0 %1339
        %1342 = vset.pattern.permute.xlu0 1
        %1343 = vperm.xlu0 %1342, %v887
        %v1344 = vpop.permute.xlu0 %1343
        %1346 = vset.pattern.permute.xlu0 1
        %1347 = vperm.xlu0 %1346, %v888
        %v1348 = vpop.permute.xlu0 %1347
        %1350 = vset.pattern.permute.xlu0 1
        %1351 = vperm.xlu0 %1350, %v889
        %v1352 = vpop.permute.xlu0 %1351
        %1354 = vset.pattern.permute.xlu0 1
        %1355 = vperm.xlu0 %1354, %v890
        %v1356 = vpop.permute.xlu0 %1355
        %1358 = vset.pattern.permute.xlu0 1
        %1359 = vperm.xlu0 %1358, %v891
        %v1360 = vpop.permute.xlu0 %1359
        %1362 = vset.pattern.permute.xlu0 1
        %1363 = vperm.xlu0 %1362, %v892
        %v1364 = vpop.permute.xlu0 %1363
        %1366 = vset.pattern.permute.xlu0 1
        %1367 = vperm.xlu0 %1366, %v893
        %v1368 = vpop.permute.xlu0 %1367
        %1370 = vset.pattern.permute.xlu0 1
        %1371 = vperm.xlu0 %1370, %v894
        %v1372 = vpop.permute.xlu0 %1371
        %1374 = vset.pattern.permute.xlu0 1
        %1375 = vperm.xlu0 %1374, %v895
        %v1376 = vpop.permute.xlu0 %1375
        %1378 = vset.pattern.permute.xlu0 1
        %1379 = vperm.xlu0 %1378, %v896
        %v1380 = vpop.permute.xlu0 %1379
        %1382 = vset.pattern.permute.xlu0 1
        %1383 = vperm.xlu0 %1382, %v897
        %v1384 = vpop.permute.xlu0 %1383
        %1386 = vset.pattern.permute.xlu0 1
        %1387 = vperm.xlu0 %1386, %v898
        %v1388 = vpop.permute.xlu0 %1387
        %1390 = vset.pattern.permute.xlu0 1
        %1391 = vperm.xlu0 %1390, %v899
        %v1392 = vpop.permute.xlu0 %1391
        %1394 = vset.pattern.permute.xlu0 1
        %1395 = vperm.xlu0 %1394, %v900
        %v1396 = vpop.permute.xlu0 %1395
        %1398 = vset.pattern.permute.xlu0 1
        %1399 = vperm.xlu0 %1398, %v901
        %v1400 = vpop.permute.xlu0 %1399
        %1402 = vset.pattern.permute.xlu0 1
        %1403 = vperm.xlu0 %1402, %v902
        %v1404 = vpop.permute.xlu0 %1403
        %1406 = vset.pattern.permute.xlu0 1
        %1407 = vperm.xlu0 %1406, %v903
        %v1408 = vpop.permute.xlu0 %1407
        %1410 = vset.pattern.permute.xlu0 1
        %1411 = vperm.xlu0 %1410, %v904
        %v1412 = vpop.permute.xlu0 %1411
        %v1414 = vsub.f32 %v1279, %v1288
        %v1415 = vsub.f32 %v1283, %v1288
        %v1416 = vsub.f32 %v1279, %v1292
        %v1417 = vsub.f32 %v1283, %v1292
        %v1418 = vsub.f32 %v1279, %v1296
        %v1419 = vsub.f32 %v1283, %v1296
        %v1420 = vsub.f32 %v1279, %v1300
        %v1421 = vsub.f32 %v1283, %v1300
        %v1422 = vsub.f32 %v1279, %v1304
        %v1423 = vsub.f32 %v1283, %v1304
        %v1424 = vsub.f32 %v1279, %v1308
        %v1425 = vsub.f32 %v1283, %v1308
        %v1426 = vsub.f32 %v1279, %v1312
        %v1427 = vsub.f32 %v1283, %v1312
        %v1428 = vsub.f32 %v1279, %v1316
        %v1429 = vsub.f32 %v1283, %v1316
        %v1430 = vsub.f32 %v1279, %v1320
        %v1431 = vsub.f32 %v1283, %v1320
        %v1432 = vsub.f32 %v1279, %v1324
        %v1433 = vsub.f32 %v1283, %v1324
        %v1434 = vsub.f32 %v1279, %v1328
        %v1435 = vsub.f32 %v1283, %v1328
        %v1436 = vsub.f32 %v1279, %v1332
        %v1437 = vsub.f32 %v1283, %v1332
        %v1438 = vsub.f32 %v1279, %v1336
        %v1439 = vsub.f32 %v1283, %v1336
        %v1440 = vsub.f32 %v1279, %v1340
        %v1441 = vsub.f32 %v1283, %v1340
        %v1442 = vsub.f32 %v1279, %v1344
        %v1443 = vsub.f32 %v1283, %v1344
        %v1444 = vsub.f32 %v1279, %v1348
        %v1445 = vsub.f32 %v1283, %v1348
        %v1446 = vsub.f32 %v1279, %v1352
        %v1447 = vsub.f32 %v1283, %v1352
        %v1448 = vsub.f32 %v1279, %v1356
        %v1449 = vsub.f32 %v1283, %v1356
        %v1450 = vsub.f32 %v1279, %v1360
        %v1451 = vsub.f32 %v1283, %v1360
        %v1452 = vsub.f32 %v1279, %v1364
        %v1453 = vsub.f32 %v1283, %v1364
        %v1454 = vsub.f32 %v1279, %v1368
        %v1455 = vsub.f32 %v1283, %v1368
        %v1456 = vsub.f32 %v1279, %v1372
        %v1457 = vsub.f32 %v1283, %v1372
        %v1458 = vsub.f32 %v1279, %v1376
        %v1459 = vsub.f32 %v1283, %v1376
        %v1460 = vsub.f32 %v1279, %v1380
        %v1461 = vsub.f32 %v1283, %v1380
        %v1462 = vsub.f32 %v1279, %v1384
        %v1463 = vsub.f32 %v1283, %v1384
        %v1464 = vsub.f32 %v1279, %v1388
        %v1465 = vsub.f32 %v1283, %v1388
        %v1466 = vsub.f32 %v1279, %v1392
        %v1467 = vsub.f32 %v1283, %v1392
        %v1468 = vsub.f32 %v1279, %v1396
        %v1469 = vsub.f32 %v1283, %v1396
        %v1470 = vsub.f32 %v1279, %v1400
        %v1471 = vsub.f32 %v1283, %v1400
        %v1472 = vsub.f32 %v1279, %v1404
        %v1473 = vsub.f32 %v1283, %v1404
        %v1474 = vsub.f32 %v1279, %v1408
        %v1475 = vsub.f32 %v1283, %v1408
        %v1476 = vsub.f32 %v1279, %v1412
        %v1477 = vsub.f32 %v1283, %v1412
        %v1478 = vmul.f32 %v361, %v1414
        %v1479 = vmul.f32 %v368, %v1415
        %v1480 = vmul.f32 %v375, %v1416
        %v1481 = vmul.f32 %v382, %v1417
        %v1482 = vmul.f32 %v389, %v1418
        %v1483 = vmul.f32 %v396, %v1419
        %v1484 = vmul.f32 %v403, %v1420
        %v1485 = vmul.f32 %v410, %v1421
        %v1486 = vmul.f32 %v417, %v1422
        %v1487 = vmul.f32 %v424, %v1423
        %v1488 = vmul.f32 %v431, %v1424
        %v1489 = vmul.f32 %v438, %v1425
        %v1490 = vmul.f32 %v445, %v1426
        %v1491 = vmul.f32 %v452, %v1427
        %v1492 = vmul.f32 %v459, %v1428
        %v1493 = vmul.f32 %v466, %v1429
        %v1494 = vmul.f32 %v473, %v1430
        %v1495 = vmul.f32 %v480, %v1431
        %v1496 = vmul.f32 %v487, %v1432
        %v1497 = vmul.f32 %v494, %v1433
        %v1498 = vmul.f32 %v501, %v1434
        %v1499 = vmul.f32 %v508, %v1435
        %v1500 = vmul.f32 %v515, %v1436
        %v1501 = vmul.f32 %v522, %v1437
        %v1502 = vmul.f32 %v529, %v1438
        %v1503 = vmul.f32 %v536, %v1439
        %v1504 = vmul.f32 %v543, %v1440
        %v1505 = vmul.f32 %v550, %v1441
        %v1506 = vmul.f32 %v557, %v1442
        %v1507 = vmul.f32 %v564, %v1443
        %v1508 = vmul.f32 %v571, %v1444
        %v1509 = vmul.f32 %v578, %v1445
        %v1510 = vmul.f32 %v585, %v1446
        %v1511 = vmul.f32 %v592, %v1447
        %v1512 = vmul.f32 %v599, %v1448
        %v1513 = vmul.f32 %v606, %v1449
        %v1514 = vmul.f32 %v613, %v1450
        %v1515 = vmul.f32 %v620, %v1451
        %v1516 = vmul.f32 %v627, %v1452
        %v1517 = vmul.f32 %v634, %v1453
        %v1518 = vmul.f32 %v641, %v1454
        %v1519 = vmul.f32 %v648, %v1455
        %v1520 = vmul.f32 %v655, %v1456
        %v1521 = vmul.f32 %v662, %v1457
        %v1522 = vmul.f32 %v669, %v1458
        %v1523 = vmul.f32 %v676, %v1459
        %v1524 = vmul.f32 %v683, %v1460
        %v1525 = vmul.f32 %v690, %v1461
        %v1526 = vmul.f32 %v697, %v1462
        %v1527 = vmul.f32 %v704, %v1463
        %v1528 = vmul.f32 %v711, %v1464
        %v1529 = vmul.f32 %v718, %v1465
        %v1530 = vmul.f32 %v725, %v1466
        %v1531 = vmul.f32 %v732, %v1467
        %v1532 = vmul.f32 %v739, %v1468
        %v1533 = vmul.f32 %v746, %v1469
        %v1534 = vmul.f32 %v753, %v1470
        %v1535 = vmul.f32 %v760, %v1471
        %v1536 = vmul.f32 %v767, %v1472
        %v1537 = vmul.f32 %v774, %v1473
        %v1538 = vmul.f32 %v781, %v1474
        %v1539 = vmul.f32 %v788, %v1475
        %v1540 = vmul.f32 %v795, %v1476
        %v1541 = vmul.f32 %v802, %v1477
        %v1542 = vmax.f32 %v1478, %v1482
        %v1543 = vmax.f32 %v1480, %v1484
        %v1544 = vmax.f32 %v1542, %v1486
        %v1545 = vmax.f32 %v1543, %v1488
        %v1546 = vmax.f32 %v1544, %v1490
        %v1547 = vmax.f32 %v1545, %v1492
        %v1548 = vmax.f32 %v1546, %v1494
        %v1549 = vmax.f32 %v1547, %v1496
        %v1550 = vmax.f32 %v1548, %v1498
        %v1551 = vmax.f32 %v1549, %v1500
        %v1552 = vmax.f32 %v1550, %v1502
        %v1553 = vmax.f32 %v1551, %v1504
        %v1554 = vmax.f32 %v1552, %v1506
        %v1555 = vmax.f32 %v1553, %v1508
        %v1556 = vmax.f32 %v1554, %v1510
        %v1557 = vmax.f32 %v1555, %v1512
        %v1558 = vmax.f32 %v1556, %v1514
        %v1559 = vmax.f32 %v1557, %v1516
        %v1560 = vmax.f32 %v1558, %v1518
        %v1561 = vmax.f32 %v1559, %v1520
        %v1562 = vmax.f32 %v1560, %v1522
        %v1563 = vmax.f32 %v1561, %v1524
        %v1564 = vmax.f32 %v1562, %v1526
        %v1565 = vmax.f32 %v1563, %v1528
        %v1566 = vmax.f32 %v1564, %v1530
        %v1567 = vmax.f32 %v1565, %v1532
        %v1568 = vmax.f32 %v1566, %v1534
        %v1569 = vmax.f32 %v1567, %v1536
        %v1570 = vmax.f32 %v1568, %v1538
        %v1571 = vmax.f32 %v1569, %v1540
        %v1572 = vmax.f32 %v1570, %v1571
        %v1573 = vmax.f32 %v1479, %v1483
        %v1574 = vmax.f32 %v1481, %v1485
        %v1575 = vmax.f32 %v1573, %v1487
        %v1576 = vmax.f32 %v1574, %v1489
        %v1577 = vmax.f32 %v1575, %v1491
        %v1578 = vmax.f32 %v1576, %v1493
        %v1579 = vmax.f32 %v1577, %v1495
        %v1580 = vmax.f32 %v1578, %v1497
        %v1581 = vmax.f32 %v1579, %v1499
        %v1582 = vmax.f32 %v1580, %v1501
        %v1583 = vmax.f32 %v1581, %v1503
        %v1584 = vmax.f32 %v1582, %v1505
        %v1585 = vmax.f32 %v1583, %v1507
        %v1586 = vmax.f32 %v1584, %v1509
        %v1587 = vmax.f32 %v1585, %v1511
        %v1588 = vmax.f32 %v1586, %v1513
        %v1589 = vmax.f32 %v1587, %v1515
        %v1590 = vmax.f32 %v1588, %v1517
        %v1591 = vmax.f32 %v1589, %v1519
        %v1592 = vmax.f32 %v1590, %v1521
        %v1593 = vmax.f32 %v1591, %v1523
        %v1594 = vmax.f32 %v1592, %v1525
        %v1595 = vmax.f32 %v1593, %v1527
        %v1596 = vmax.f32 %v1594, %v1529
        %v1597 = vmax.f32 %v1595, %v1531
        %v1598 = vmax.f32 %v1596, %v1533
        %v1599 = vmax.f32 %v1597, %v1535
        %v1600 = vmax.f32 %v1598, %v1537
        %v1601 = vmax.f32 %v1599, %v1539
        %v1602 = vmax.f32 %v1600, %v1541
        %v1603 = vmax.f32 %v1601, %v1602
        %s1604 = scalar_lea.vmem [#allocation2], 16
        %v1605 = vld [vmem:[%s1604] sm:$0xff]
        %v1606 = vld [vmem:[%s1604 + $0x8] sm:$0xff]
        %v1607 = vmax.f32 %v1605, %v1572
        %v1608 = vmax.f32 %v1606, %v1603
        %1609 = vst [vmem:[%s1604] sm:$0xff] %v1607
        %1610 = vst [vmem:[%s1604 + $0x8] sm:$0xff] %v1608
        %s1611 = scalar_lea.vmem %s267, 2
        %v1612 = vld [vmem:[%s1611] ss:$4 sm:$0x3]
        %v1614 = vlaneseq
        %v1615 = vshrl.u32 %v1614, 7
        %v1616 = vsub.s32 0, %v1615
        %v1617 = vrot.slane %v1612, %v1616
        %v1618 = vlaneseq
        %v1619 = vshrl.u32 %v1618, 7
        %v1620 = vsub.s32 1, %v1619
        %v1621 = vrot.slane %v1612, %v1620
        %1624 = vset.pattern.permute.xlu0 2
        %1625 = vperm.xlu0 %1624, %v873
        %v1626 = vpop.permute.xlu0 %1625
        %1628 = vset.pattern.permute.xlu0 2
        %1629 = vperm.xlu0 %1628, %v874
        %v1630 = vpop.permute.xlu0 %1629
        %1632 = vset.pattern.permute.xlu0 2
        %1633 = vperm.xlu0 %1632, %v875
        %v1634 = vpop.permute.xlu0 %1633
        %1636 = vset.pattern.permute.xlu0 2
        %1637 = vperm.xlu0 %1636, %v876
        %v1638 = vpop.permute.xlu0 %1637
        %1640 = vset.pattern.permute.xlu0 2
        %1641 = vperm.xlu0 %1640, %v877
        %v1642 = vpop.permute.xlu0 %1641
        %1644 = vset.pattern.permute.xlu0 2
        %1645 = vperm.xlu0 %1644, %v878
        %v1646 = vpop.permute.xlu0 %1645
        %1648 = vset.pattern.permute.xlu0 2
        %1649 = vperm.xlu0 %1648, %v879
        %v1650 = vpop.permute.xlu0 %1649
        %1652 = vset.pattern.permute.xlu0 2
        %1653 = vperm.xlu0 %1652, %v880
        %v1654 = vpop.permute.xlu0 %1653
        %1656 = vset.pattern.permute.xlu0 2
        %1657 = vperm.xlu0 %1656, %v881
        %v1658 = vpop.permute.xlu0 %1657
        %1660 = vset.pattern.permute.xlu0 2
        %1661 = vperm.xlu0 %1660, %v882
        %v1662 = vpop.permute.xlu0 %1661
        %1664 = vset.pattern.permute.xlu0 2
        %1665 = vperm.xlu0 %1664, %v883
        %v1666 = vpop.permute.xlu0 %1665
        %1668 = vset.pattern.permute.xlu0 2
        %1669 = vperm.xlu0 %1668, %v884
        %v1670 = vpop.permute.xlu0 %1669
        %1672 = vset.pattern.permute.xlu0 2
        %1673 = vperm.xlu0 %1672, %v885
        %v1674 = vpop.permute.xlu0 %1673
        %1676 = vset.pattern.permute.xlu0 2
        %1677 = vperm.xlu0 %1676, %v886
        %v1678 = vpop.permute.xlu0 %1677
        %1680 = vset.pattern.permute.xlu0 2
        %1681 = vperm.xlu0 %1680, %v887
        %v1682 = vpop.permute.xlu0 %1681
        %1684 = vset.pattern.permute.xlu0 2
        %1685 = vperm.xlu0 %1684, %v888
        %v1686 = vpop.permute.xlu0 %1685
        %1688 = vset.pattern.permute.xlu0 2
        %1689 = vperm.xlu0 %1688, %v889
        %v1690 = vpop.permute.xlu0 %1689
        %1692 = vset.pattern.permute.xlu0 2
        %1693 = vperm.xlu0 %1692, %v890
        %v1694 = vpop.permute.xlu0 %1693
        %1696 = vset.pattern.permute.xlu0 2
        %1697 = vperm.xlu0 %1696, %v891
        %v1698 = vpop.permute.xlu0 %1697
        %1700 = vset.pattern.permute.xlu0 2
        %1701 = vperm.xlu0 %1700, %v892
        %v1702 = vpop.permute.xlu0 %1701
        %1704 = vset.pattern.permute.xlu0 2
        %1705 = vperm.xlu0 %1704, %v893
        %v1706 = vpop.permute.xlu0 %1705
        %1708 = vset.pattern.permute.xlu0 2
        %1709 = vperm.xlu0 %1708, %v894
        %v1710 = vpop.permute.xlu0 %1709
        %1712 = vset.pattern.permute.xlu0 2
        %1713 = vperm.xlu0 %1712, %v895
        %v1714 = vpop.permute.xlu0 %1713
        %1716 = vset.pattern.permute.xlu0 2
        %1717 = vperm.xlu0 %1716, %v896
        %v1718 = vpop.permute.xlu0 %1717
        %1720 = vset.pattern.permute.xlu0 2
        %1721 = vperm.xlu0 %1720, %v897
        %v1722 = vpop.permute.xlu0 %1721
        %1724 = vset.pattern.permute.xlu0 2
        %1725 = vperm.xlu0 %1724, %v898
        %v1726 = vpop.permute.xlu0 %1725
        %1728 = vset.pattern.permute.xlu0 2
        %1729 = vperm.xlu0 %1728, %v899
        %v1730 = vpop.permute.xlu0 %1729
        %1732 = vset.pattern.permute.xlu0 2
        %1733 = vperm.xlu0 %1732, %v900
        %v1734 = vpop.permute.xlu0 %1733
        %1736 = vset.pattern.permute.xlu0 2
        %1737 = vperm.xlu0 %1736, %v901
        %v1738 = vpop.permute.xlu0 %1737
        %1740 = vset.pattern.permute.xlu0 2
        %1741 = vperm.xlu0 %1740, %v902
        %v1742 = vpop.permute.xlu0 %1741
        %1744 = vset.pattern.permute.xlu0 2
        %1745 = vperm.xlu0 %1744, %v903
        %v1746 = vpop.permute.xlu0 %1745
        %1748 = vset.pattern.permute.xlu0 2
        %1749 = vperm.xlu0 %1748, %v904
        %v1750 = vpop.permute.xlu0 %1749
        %v1752 = vsub.f32 %v1617, %v1626
        %v1753 = vsub.f32 %v1621, %v1626
        %v1754 = vsub.f32 %v1617, %v1630
        %v1755 = vsub.f32 %v1621, %v1630
        %v1756 = vsub.f32 %v1617, %v1634
        %v1757 = vsub.f32 %v1621, %v1634
        %v1758 = vsub.f32 %v1617, %v1638
        %v1759 = vsub.f32 %v1621, %v1638
        %v1760 = vsub.f32 %v1617, %v1642
        %v1761 = vsub.f32 %v1621, %v1642
        %v1762 = vsub.f32 %v1617, %v1646
        %v1763 = vsub.f32 %v1621, %v1646
        %v1764 = vsub.f32 %v1617, %v1650
        %v1765 = vsub.f32 %v1621, %v1650
        %v1766 = vsub.f32 %v1617, %v1654
        %v1767 = vsub.f32 %v1621, %v1654
        %v1768 = vsub.f32 %v1617, %v1658
        %v1769 = vsub.f32 %v1621, %v1658
        %v1770 = vsub.f32 %v1617, %v1662
        %v1771 = vsub.f32 %v1621, %v1662
        %v1772 = vsub.f32 %v1617, %v1666
        %v1773 = vsub.f32 %v1621, %v1666
        %v1774 = vsub.f32 %v1617, %v1670
        %v1775 = vsub.f32 %v1621, %v1670
        %v1776 = vsub.f32 %v1617, %v1674
        %v1777 = vsub.f32 %v1621, %v1674
        %v1778 = vsub.f32 %v1617, %v1678
        %v1779 = vsub.f32 %v1621, %v1678
        %v1780 = vsub.f32 %v1617, %v1682
        %v1781 = vsub.f32 %v1621, %v1682
        %v1782 = vsub.f32 %v1617, %v1686
        %v1783 = vsub.f32 %v1621, %v1686
        %v1784 = vsub.f32 %v1617, %v1690
        %v1785 = vsub.f32 %v1621, %v1690
        %v1786 = vsub.f32 %v1617, %v1694
        %v1787 = vsub.f32 %v1621, %v1694
        %v1788 = vsub.f32 %v1617, %v1698
        %v1789 = vsub.f32 %v1621, %v1698
        %v1790 = vsub.f32 %v1617, %v1702
        %v1791 = vsub.f32 %v1621, %v1702
        %v1792 = vsub.f32 %v1617, %v1706
        %v1793 = vsub.f32 %v1621, %v1706
        %v1794 = vsub.f32 %v1617, %v1710
        %v1795 = vsub.f32 %v1621, %v1710
        %v1796 = vsub.f32 %v1617, %v1714
        %v1797 = vsub.f32 %v1621, %v1714
        %v1798 = vsub.f32 %v1617, %v1718
        %v1799 = vsub.f32 %v1621, %v1718
        %v1800 = vsub.f32 %v1617, %v1722
        %v1801 = vsub.f32 %v1621, %v1722
        %v1802 = vsub.f32 %v1617, %v1726
        %v1803 = vsub.f32 %v1621, %v1726
        %v1804 = vsub.f32 %v1617, %v1730
        %v1805 = vsub.f32 %v1621, %v1730
        %v1806 = vsub.f32 %v1617, %v1734
        %v1807 = vsub.f32 %v1621, %v1734
        %v1808 = vsub.f32 %v1617, %v1738
        %v1809 = vsub.f32 %v1621, %v1738
        %v1810 = vsub.f32 %v1617, %v1742
        %v1811 = vsub.f32 %v1621, %v1742
        %v1812 = vsub.f32 %v1617, %v1746
        %v1813 = vsub.f32 %v1621, %v1746
        %v1814 = vsub.f32 %v1617, %v1750
        %v1815 = vsub.f32 %v1621, %v1750
        %v1816 = vmul.f32 %v361, %v1752
        %v1817 = vmul.f32 %v368, %v1753
        %v1818 = vmul.f32 %v375, %v1754
        %v1819 = vmul.f32 %v382, %v1755
        %v1820 = vmul.f32 %v389, %v1756
        %v1821 = vmul.f32 %v396, %v1757
        %v1822 = vmul.f32 %v403, %v1758
        %v1823 = vmul.f32 %v410, %v1759
        %v1824 = vmul.f32 %v417, %v1760
        %v1825 = vmul.f32 %v424, %v1761
        %v1826 = vmul.f32 %v431, %v1762
        %v1827 = vmul.f32 %v438, %v1763
        %v1828 = vmul.f32 %v445, %v1764
        %v1829 = vmul.f32 %v452, %v1765
        %v1830 = vmul.f32 %v459, %v1766
        %v1831 = vmul.f32 %v466, %v1767
        %v1832 = vmul.f32 %v473, %v1768
        %v1833 = vmul.f32 %v480, %v1769
        %v1834 = vmul.f32 %v487, %v1770
        %v1835 = vmul.f32 %v494, %v1771
        %v1836 = vmul.f32 %v501, %v1772
        %v1837 = vmul.f32 %v508, %v1773
        %v1838 = vmul.f32 %v515, %v1774
        %v1839 = vmul.f32 %v522, %v1775
        %v1840 = vmul.f32 %v529, %v1776
        %v1841 = vmul.f32 %v536, %v1777
        %v1842 = vmul.f32 %v543, %v1778
        %v1843 = vmul.f32 %v550, %v1779
        %v1844 = vmul.f32 %v557, %v1780
        %v1845 = vmul.f32 %v564, %v1781
        %v1846 = vmul.f32 %v571, %v1782
        %v1847 = vmul.f32 %v578, %v1783
        %v1848 = vmul.f32 %v585, %v1784
        %v1849 = vmul.f32 %v592, %v1785
        %v1850 = vmul.f32 %v599, %v1786
        %v1851 = vmul.f32 %v606, %v1787
        %v1852 = vmul.f32 %v613, %v1788
        %v1853 = vmul.f32 %v620, %v1789
        %v1854 = vmul.f32 %v627, %v1790
        %v1855 = vmul.f32 %v634, %v1791
        %v1856 = vmul.f32 %v641, %v1792
        %v1857 = vmul.f32 %v648, %v1793
        %v1858 = vmul.f32 %v655, %v1794
        %v1859 = vmul.f32 %v662, %v1795
        %v1860 = vmul.f32 %v669, %v1796
        %v1861 = vmul.f32 %v676, %v1797
        %v1862 = vmul.f32 %v683, %v1798
        %v1863 = vmul.f32 %v690, %v1799
        %v1864 = vmul.f32 %v697, %v1800
        %v1865 = vmul.f32 %v704, %v1801
        %v1866 = vmul.f32 %v711, %v1802
        %v1867 = vmul.f32 %v718, %v1803
        %v1868 = vmul.f32 %v725, %v1804
        %v1869 = vmul.f32 %v732, %v1805
        %v1870 = vmul.f32 %v739, %v1806
        %v1871 = vmul.f32 %v746, %v1807
        %v1872 = vmul.f32 %v753, %v1808
        %v1873 = vmul.f32 %v760, %v1809
        %v1874 = vmul.f32 %v767, %v1810
        %v1875 = vmul.f32 %v774, %v1811
        %v1876 = vmul.f32 %v781, %v1812
        %v1877 = vmul.f32 %v788, %v1813
        %v1878 = vmul.f32 %v795, %v1814
        %v1879 = vmul.f32 %v802, %v1815
        %v1880 = vmax.f32 %v1816, %v1820
        %v1881 = vmax.f32 %v1818, %v1822
        %v1882 = vmax.f32 %v1880, %v1824
        %v1883 = vmax.f32 %v1881, %v1826
        %v1884 = vmax.f32 %v1882, %v1828
        %v1885 = vmax.f32 %v1883, %v1830
        %v1886 = vmax.f32 %v1884, %v1832
        %v1887 = vmax.f32 %v1885, %v1834
        %v1888 = vmax.f32 %v1886, %v1836
        %v1889 = vmax.f32 %v1887, %v1838
        %v1890 = vmax.f32 %v1888, %v1840
        %v1891 = vmax.f32 %v1889, %v1842
        %v1892 = vmax.f32 %v1890, %v1844
        %v1893 = vmax.f32 %v1891, %v1846
        %v1894 = vmax.f32 %v1892, %v1848
        %v1895 = vmax.f32 %v1893, %v1850
        %v1896 = vmax.f32 %v1894, %v1852
        %v1897 = vmax.f32 %v1895, %v1854
        %v1898 = vmax.f32 %v1896, %v1856
        %v1899 = vmax.f32 %v1897, %v1858
        %v1900 = vmax.f32 %v1898, %v1860
        %v1901 = vmax.f32 %v1899, %v1862
        %v1902 = vmax.f32 %v1900, %v1864
        %v1903 = vmax.f32 %v1901, %v1866
        %v1904 = vmax.f32 %v1902, %v1868
        %v1905 = vmax.f32 %v1903, %v1870
        %v1906 = vmax.f32 %v1904, %v1872
        %v1907 = vmax.f32 %v1905, %v1874
        %v1908 = vmax.f32 %v1906, %v1876
        %v1909 = vmax.f32 %v1907, %v1878
        %v1910 = vmax.f32 %v1908, %v1909
        %v1911 = vmax.f32 %v1817, %v1821
        %v1912 = vmax.f32 %v1819, %v1823
        %v1913 = vmax.f32 %v1911, %v1825
        %v1914 = vmax.f32 %v1912, %v1827
        %v1915 = vmax.f32 %v1913, %v1829
        %v1916 = vmax.f32 %v1914, %v1831
        %v1917 = vmax.f32 %v1915, %v1833
        %v1918 = vmax.f32 %v1916, %v1835
        %v1919 = vmax.f32 %v1917, %v1837
        %v1920 = vmax.f32 %v1918, %v1839
        %v1921 = vmax.f32 %v1919, %v1841
        %v1922 = vmax.f32 %v1920, %v1843
        %v1923 = vmax.f32 %v1921, %v1845
        %v1924 = vmax.f32 %v1922, %v1847
        %v1925 = vmax.f32 %v1923, %v1849
        %v1926 = vmax.f32 %v1924, %v1851
        %v1927 = vmax.f32 %v1925, %v1853
        %v1928 = vmax.f32 %v1926, %v1855
        %v1929 = vmax.f32 %v1927, %v1857
        %v1930 = vmax.f32 %v1928, %v1859
        %v1931 = vmax.f32 %v1929, %v1861
        %v1932 = vmax.f32 %v1930, %v1863
        %v1933 = vmax.f32 %v1931, %v1865
        %v1934 = vmax.f32 %v1932, %v1867
        %v1935 = vmax.f32 %v1933, %v1869
        %v1936 = vmax.f32 %v1934, %v1871
        %v1937 = vmax.f32 %v1935, %v1873
        %v1938 = vmax.f32 %v1936, %v1875
        %v1939 = vmax.f32 %v1937, %v1877
        %v1940 = vmax.f32 %v1938, %v1879
        %v1941 = vmax.f32 %v1939, %v1940
        %s1942 = scalar_lea.vmem [#allocation2], 32
        %v1943 = vld [vmem:[%s1942] sm:$0xff]
        %v1944 = vld [vmem:[%s1942 + $0x8] sm:$0xff]
        %v1945 = vmax.f32 %v1943, %v1910
        %v1946 = vmax.f32 %v1944, %v1941
        %1947 = vst [vmem:[%s1942] sm:$0xff] %v1945
        %1948 = vst [vmem:[%s1942 + $0x8] sm:$0xff] %v1946
        %s1949 = scalar_lea.vmem %s267, 3
        %v1950 = vld [vmem:[%s1949] ss:$4 sm:$0x3]
        %v1952 = vlaneseq
        %v1953 = vshrl.u32 %v1952, 7
        %v1954 = vsub.s32 0, %v1953
        %v1955 = vrot.slane %v1950, %v1954
        %v1956 = vlaneseq
        %v1957 = vshrl.u32 %v1956, 7
        %v1958 = vsub.s32 1, %v1957
        %v1959 = vrot.slane %v1950, %v1958
        %1962 = vset.pattern.permute.xlu0 3
        %1963 = vperm.xlu0 %1962, %v873
        %v1964 = vpop.permute.xlu0 %1963
        %1966 = vset.pattern.permute.xlu0 3
        %1967 = vperm.xlu0 %1966, %v874
        %v1968 = vpop.permute.xlu0 %1967
        %1970 = vset.pattern.permute.xlu0 3
        %1971 = vperm.xlu0 %1970, %v875
        %v1972 = vpop.permute.xlu0 %1971
        %1974 = vset.pattern.permute.xlu0 3
        %1975 = vperm.xlu0 %1974, %v876
        %v1976 = vpop.permute.xlu0 %1975
        %1978 = vset.pattern.permute.xlu0 3
        %1979 = vperm.xlu0 %1978, %v877
        %v1980 = vpop.permute.xlu0 %1979
        %1982 = vset.pattern.permute.xlu0 3
        %1983 = vperm.xlu0 %1982, %v878
        %v1984 = vpop.permute.xlu0 %1983
        %1986 = vset.pattern.permute.xlu0 3
        %1987 = vperm.xlu0 %1986, %v879
        %v1988 = vpop.permute.xlu0 %1987
        %1990 = vset.pattern.permute.xlu0 3
        %1991 = vperm.xlu0 %1990, %v880
        %v1992 = vpop.permute.xlu0 %1991
        %1994 = vset.pattern.permute.xlu0 3
        %1995 = vperm.xlu0 %1994, %v881
        %v1996 = vpop.permute.xlu0 %1995
        %1998 = vset.pattern.permute.xlu0 3
        %1999 = vperm.xlu0 %1998, %v882
        %v2000 = vpop.permute.xlu0 %1999
        %2002 = vset.pattern.permute.xlu0 3
        %2003 = vperm.xlu0 %2002, %v883
        %v2004 = vpop.permute.xlu0 %2003
        %2006 = vset.pattern.permute.xlu0 3
        %2007 = vperm.xlu0 %2006, %v884
        %v2008 = vpop.permute.xlu0 %2007
        %2010 = vset.pattern.permute.xlu0 3
        %2011 = vperm.xlu0 %2010, %v885
        %v2012 = vpop.permute.xlu0 %2011
        %2014 = vset.pattern.permute.xlu0 3
        %2015 = vperm.xlu0 %2014, %v886
        %v2016 = vpop.permute.xlu0 %2015
        %2018 = vset.pattern.permute.xlu0 3
        %2019 = vperm.xlu0 %2018, %v887
        %v2020 = vpop.permute.xlu0 %2019
        %2022 = vset.pattern.permute.xlu0 3
        %2023 = vperm.xlu0 %2022, %v888
        %v2024 = vpop.permute.xlu0 %2023
        %2026 = vset.pattern.permute.xlu0 3
        %2027 = vperm.xlu0 %2026, %v889
        %v2028 = vpop.permute.xlu0 %2027
        %2030 = vset.pattern.permute.xlu0 3
        %2031 = vperm.xlu0 %2030, %v890
        %v2032 = vpop.permute.xlu0 %2031
        %2034 = vset.pattern.permute.xlu0 3
        %2035 = vperm.xlu0 %2034, %v891
        %v2036 = vpop.permute.xlu0 %2035
        %2038 = vset.pattern.permute.xlu0 3
        %2039 = vperm.xlu0 %2038, %v892
        %v2040 = vpop.permute.xlu0 %2039
        %2042 = vset.pattern.permute.xlu0 3
        %2043 = vperm.xlu0 %2042, %v893
        %v2044 = vpop.permute.xlu0 %2043
        %2046 = vset.pattern.permute.xlu0 3
        %2047 = vperm.xlu0 %2046, %v894
        %v2048 = vpop.permute.xlu0 %2047
        %2050 = vset.pattern.permute.xlu0 3
        %2051 = vperm.xlu0 %2050, %v895
        %v2052 = vpop.permute.xlu0 %2051
        %2054 = vset.pattern.permute.xlu0 3
        %2055 = vperm.xlu0 %2054, %v896
        %v2056 = vpop.permute.xlu0 %2055
        %2058 = vset.pattern.permute.xlu0 3
        %2059 = vperm.xlu0 %2058, %v897
        %v2060 = vpop.permute.xlu0 %2059
        %2062 = vset.pattern.permute.xlu0 3
        %2063 = vperm.xlu0 %2062, %v898
        %v2064 = vpop.permute.xlu0 %2063
        %2066 = vset.pattern.permute.xlu0 3
        %2067 = vperm.xlu0 %2066, %v899
        %v2068 = vpop.permute.xlu0 %2067
        %2070 = vset.pattern.permute.xlu0 3
        %2071 = vperm.xlu0 %2070, %v900
        %v2072 = vpop.permute.xlu0 %2071
        %2074 = vset.pattern.permute.xlu0 3
        %2075 = vperm.xlu0 %2074, %v901
        %v2076 = vpop.permute.xlu0 %2075
        %2078 = vset.pattern.permute.xlu0 3
        %2079 = vperm.xlu0 %2078, %v902
        %v2080 = vpop.permute.xlu0 %2079
        %2082 = vset.pattern.permute.xlu0 3
        %2083 = vperm.xlu0 %2082, %v903
        %v2084 = vpop.permute.xlu0 %2083
        %2086 = vset.pattern.permute.xlu0 3
        %2087 = vperm.xlu0 %2086, %v904
        %v2088 = vpop.permute.xlu0 %2087
        %v2090 = vsub.f32 %v1955, %v1964
        %v2091 = vsub.f32 %v1959, %v1964
        %v2092 = vsub.f32 %v1955, %v1968
        %v2093 = vsub.f32 %v1959, %v1968
        %v2094 = vsub.f32 %v1955, %v1972
        %v2095 = vsub.f32 %v1959, %v1972
        %v2096 = vsub.f32 %v1955, %v1976
        %v2097 = vsub.f32 %v1959, %v1976
        %v2098 = vsub.f32 %v1955, %v1980
        %v2099 = vsub.f32 %v1959, %v1980
        %v2100 = vsub.f32 %v1955, %v1984
        %v2101 = vsub.f32 %v1959, %v1984
        %v2102 = vsub.f32 %v1955, %v1988
        %v2103 = vsub.f32 %v1959, %v1988
        %v2104 = vsub.f32 %v1955, %v1992
        %v2105 = vsub.f32 %v1959, %v1992
        %v2106 = vsub.f32 %v1955, %v1996
        %v2107 = vsub.f32 %v1959, %v1996
        %v2108 = vsub.f32 %v1955, %v2000
        %v2109 = vsub.f32 %v1959, %v2000
        %v2110 = vsub.f32 %v1955, %v2004
        %v2111 = vsub.f32 %v1959, %v2004
        %v2112 = vsub.f32 %v1955, %v2008
        %v2113 = vsub.f32 %v1959, %v2008
        %v2114 = vsub.f32 %v1955, %v2012
        %v2115 = vsub.f32 %v1959, %v2012
        %v2116 = vsub.f32 %v1955, %v2016
        %v2117 = vsub.f32 %v1959, %v2016
        %v2118 = vsub.f32 %v1955, %v2020
        %v2119 = vsub.f32 %v1959, %v2020
        %v2120 = vsub.f32 %v1955, %v2024
        %v2121 = vsub.f32 %v1959, %v2024
        %v2122 = vsub.f32 %v1955, %v2028
        %v2123 = vsub.f32 %v1959, %v2028
        %v2124 = vsub.f32 %v1955, %v2032
        %v2125 = vsub.f32 %v1959, %v2032
        %v2126 = vsub.f32 %v1955, %v2036
        %v2127 = vsub.f32 %v1959, %v2036
        %v2128 = vsub.f32 %v1955, %v2040
        %v2129 = vsub.f32 %v1959, %v2040
        %v2130 = vsub.f32 %v1955, %v2044
        %v2131 = vsub.f32 %v1959, %v2044
        %v2132 = vsub.f32 %v1955, %v2048
        %v2133 = vsub.f32 %v1959, %v2048
        %v2134 = vsub.f32 %v1955, %v2052
        %v2135 = vsub.f32 %v1959, %v2052
        %v2136 = vsub.f32 %v1955, %v2056
        %v2137 = vsub.f32 %v1959, %v2056
        %v2138 = vsub.f32 %v1955, %v2060
        %v2139 = vsub.f32 %v1959, %v2060
        %v2140 = vsub.f32 %v1955, %v2064
        %v2141 = vsub.f32 %v1959, %v2064
        %v2142 = vsub.f32 %v1955, %v2068
        %v2143 = vsub.f32 %v1959, %v2068
        %v2144 = vsub.f32 %v1955, %v2072
        %v2145 = vsub.f32 %v1959, %v2072
        %v2146 = vsub.f32 %v1955, %v2076
        %v2147 = vsub.f32 %v1959, %v2076
        %v2148 = vsub.f32 %v1955, %v2080
        %v2149 = vsub.f32 %v1959, %v2080
        %v2150 = vsub.f32 %v1955, %v2084
        %v2151 = vsub.f32 %v1959, %v2084
        %v2152 = vsub.f32 %v1955, %v2088
        %v2153 = vsub.f32 %v1959, %v2088
        %v2154 = vmul.f32 %v361, %v2090
        %v2155 = vmul.f32 %v368, %v2091
        %v2156 = vmul.f32 %v375, %v2092
        %v2157 = vmul.f32 %v382, %v2093
        %v2158 = vmul.f32 %v389, %v2094
        %v2159 = vmul.f32 %v396, %v2095
        %v2160 = vmul.f32 %v403, %v2096
        %v2161 = vmul.f32 %v410, %v2097
        %v2162 = vmul.f32 %v417, %v2098
        %v2163 = vmul.f32 %v424, %v2099
        %v2164 = vmul.f32 %v431, %v2100
        %v2165 = vmul.f32 %v438, %v2101
        %v2166 = vmul.f32 %v445, %v2102
        %v2167 = vmul.f32 %v452, %v2103
        %v2168 = vmul.f32 %v459, %v2104
        %v2169 = vmul.f32 %v466, %v2105
        %v2170 = vmul.f32 %v473, %v2106
        %v2171 = vmul.f32 %v480, %v2107
        %v2172 = vmul.f32 %v487, %v2108
        %v2173 = vmul.f32 %v494, %v2109
        %v2174 = vmul.f32 %v501, %v2110
        %v2175 = vmul.f32 %v508, %v2111
        %v2176 = vmul.f32 %v515, %v2112
        %v2177 = vmul.f32 %v522, %v2113
        %v2178 = vmul.f32 %v529, %v2114
        %v2179 = vmul.f32 %v536, %v2115
        %v2180 = vmul.f32 %v543, %v2116
        %v2181 = vmul.f32 %v550, %v2117
        %v2182 = vmul.f32 %v557, %v2118
        %v2183 = vmul.f32 %v564, %v2119
        %v2184 = vmul.f32 %v571, %v2120
        %v2185 = vmul.f32 %v578, %v2121
        %v2186 = vmul.f32 %v585, %v2122
        %v2187 = vmul.f32 %v592, %v2123
        %v2188 = vmul.f32 %v599, %v2124
        %v2189 = vmul.f32 %v606, %v2125
        %v2190 = vmul.f32 %v613, %v2126
        %v2191 = vmul.f32 %v620, %v2127
        %v2192 = vmul.f32 %v627, %v2128
        %v2193 = vmul.f32 %v634, %v2129
        %v2194 = vmul.f32 %v641, %v2130
        %v2195 = vmul.f32 %v648, %v2131
        %v2196 = vmul.f32 %v655, %v2132
        %v2197 = vmul.f32 %v662, %v2133
        %v2198 = vmul.f32 %v669, %v2134
        %v2199 = vmul.f32 %v676, %v2135
        %v2200 = vmul.f32 %v683, %v2136
        %v2201 = vmul.f32 %v690, %v2137
        %v2202 = vmul.f32 %v697, %v2138
        %v2203 = vmul.f32 %v704, %v2139
        %v2204 = vmul.f32 %v711, %v2140
        %v2205 = vmul.f32 %v718, %v2141
        %v2206 = vmul.f32 %v725, %v2142
        %v2207 = vmul.f32 %v732, %v2143
        %v2208 = vmul.f32 %v739, %v2144
        %v2209 = vmul.f32 %v746, %v2145
        %v2210 = vmul.f32 %v753, %v2146
        %v2211 = vmul.f32 %v760, %v2147
        %v2212 = vmul.f32 %v767, %v2148
        %v2213 = vmul.f32 %v774, %v2149
        %v2214 = vmul.f32 %v781, %v2150
        %v2215 = vmul.f32 %v788, %v2151
        %v2216 = vmul.f32 %v795, %v2152
        %v2217 = vmul.f32 %v802, %v2153
        %v2218 = vmax.f32 %v2154, %v2158
        %v2219 = vmax.f32 %v2156, %v2160
        %v2220 = vmax.f32 %v2218, %v2162
        %v2221 = vmax.f32 %v2219, %v2164
        %v2222 = vmax.f32 %v2220, %v2166
        %v2223 = vmax.f32 %v2221, %v2168
        %v2224 = vmax.f32 %v2222, %v2170
        %v2225 = vmax.f32 %v2223, %v2172
        %v2226 = vmax.f32 %v2224, %v2174
        %v2227 = vmax.f32 %v2225, %v2176
        %v2228 = vmax.f32 %v2226, %v2178
        %v2229 = vmax.f32 %v2227, %v2180
        %v2230 = vmax.f32 %v2228, %v2182
        %v2231 = vmax.f32 %v2229, %v2184
        %v2232 = vmax.f32 %v2230, %v2186
        %v2233 = vmax.f32 %v2231, %v2188
        %v2234 = vmax.f32 %v2232, %v2190
        %v2235 = vmax.f32 %v2233, %v2192
        %v2236 = vmax.f32 %v2234, %v2194
        %v2237 = vmax.f32 %v2235, %v2196
        %v2238 = vmax.f32 %v2236, %v2198
        %v2239 = vmax.f32 %v2237, %v2200
        %v2240 = vmax.f32 %v2238, %v2202
        %v2241 = vmax.f32 %v2239, %v2204
        %v2242 = vmax.f32 %v2240, %v2206
        %v2243 = vmax.f32 %v2241, %v2208
        %v2244 = vmax.f32 %v2242, %v2210
        %v2245 = vmax.f32 %v2243, %v2212
        %v2246 = vmax.f32 %v2244, %v2214
        %v2247 = vmax.f32 %v2245, %v2216
        %v2248 = vmax.f32 %v2246, %v2247
        %v2249 = vmax.f32 %v2155, %v2159
        %v2250 = vmax.f32 %v2157, %v2161
        %v2251 = vmax.f32 %v2249, %v2163
        %v2252 = vmax.f32 %v2250, %v2165
        %v2253 = vmax.f32 %v2251, %v2167
        %v2254 = vmax.f32 %v2252, %v2169
        %v2255 = vmax.f32 %v2253, %v2171
        %v2256 = vmax.f32 %v2254, %v2173
        %v2257 = vmax.f32 %v2255, %v2175
        %v2258 = vmax.f32 %v2256, %v2177
        %v2259 = vmax.f32 %v2257, %v2179
        %v2260 = vmax.f32 %v2258, %v2181
        %v2261 = vmax.f32 %v2259, %v2183
        %v2262 = vmax.f32 %v2260, %v2185
        %v2263 = vmax.f32 %v2261, %v2187
        %v2264 = vmax.f32 %v2262, %v2189
        %v2265 = vmax.f32 %v2263, %v2191
        %v2266 = vmax.f32 %v2264, %v2193
        %v2267 = vmax.f32 %v2265, %v2195
        %v2268 = vmax.f32 %v2266, %v2197
        %v2269 = vmax.f32 %v2267, %v2199
        %v2270 = vmax.f32 %v2268, %v2201
        %v2271 = vmax.f32 %v2269, %v2203
        %v2272 = vmax.f32 %v2270, %v2205
        %v2273 = vmax.f32 %v2271, %v2207
        %v2274 = vmax.f32 %v2272, %v2209
        %v2275 = vmax.f32 %v2273, %v2211
        %v2276 = vmax.f32 %v2274, %v2213
        %v2277 = vmax.f32 %v2275, %v2215
        %v2278 = vmax.f32 %v2276, %v2217
        %v2279 = vmax.f32 %v2277, %v2278
        %s2280 = scalar_lea.vmem [#allocation2], 48
        %v2281 = vld [vmem:[%s2280] sm:$0xff]
        %v2282 = vld [vmem:[%s2280 + $0x8] sm:$0xff]
        %v2283 = vmax.f32 %v2281, %v2248
        %v2284 = vmax.f32 %v2282, %v2279
        %2285 = vst [vmem:[%s2280] sm:$0xff] %v2283
        %2286 = vst [vmem:[%s2280 + $0x8] sm:$0xff] %v2284
        %p2287 = scmp.eq.s32.totalorder %s26, 1
        // Predicated region
        $region45: #{tpu_custom_call.1} parent=35 // pred_check
          %p2288 = pneg %p2287
        $region46: #{tpu_custom_call.1} parent=35 // pred_check_branch
          %2290 = sbr.rel (%p2288) target = $region48
        $region47: #{tpu_custom_call.1} parent=35 // pred_region
          %v2291 = vld [vmem:[#allocation3] sm:$0xff]
          %v2292 = vld [vmem:[#allocation3 + $0x8] sm:$0xff]
          %v2293 = vrot.slane %v2291, 4
          %v2294 = vadd.f32 %v2291, %v2293
          %v2295 = vrot.slane %v2294, 2
          %v2296 = vadd.f32 %v2294, %v2295
          %v2297 = vrot.slane %v2296, 1
          %v2298 = vadd.f32 %v2296, %v2297
          %v2299 = vrot.slane %v2292, 4
          %v2300 = vadd.f32 %v2292, %v2299
          %v2301 = vrot.slane %v2300, 2
          %v2302 = vadd.f32 %v2300, %v2301
          %v2303 = vrot.slane %v2302, 1
          %v2304 = vadd.f32 %v2302, %v2303
          %vm2305 = vcmp.gt.f32.partialorder %v2298, 0.0
          %vm2306 = vcmp.gt.f32.partialorder %v2304, 0.0
          %v2307 = vsel %vm2305, %v2298, 1.0
          %v2308 = vsel %vm2306, %v2304, 1.0
          %v2309 = vrsqrt.pop %v2307
          %v2310 = vmul.f32 %v2307, %v2309
          %vm2311 = vcmp.eq.f32.partialorder %v2307, inf
          %v2312 = vsel %vm2311, %v2307, %v2310
          %vm2313 = vcmp.eq.f32.partialorder %v2307, 0.0
          %v2314 = vand.u32 %v2307, 2147483648
          %v2315 = vsel %vm2313, %v2314, %v2312
          %v2316 = vrsqrt.pop %v2308
          %v2317 = vmul.f32 %v2308, %v2316
          %vm2318 = vcmp.eq.f32.partialorder %v2308, inf
          %v2319 = vsel %vm2318, %v2308, %v2317
          %vm2320 = vcmp.eq.f32.partialorder %v2308, 0.0
          %v2321 = vand.u32 %v2308, 2147483648
          %v2322 = vsel %vm2320, %v2321, %v2319
          %v2323 = vrcp.pop %v2315
          %v2324 = vmul.f32 1.0, %v2323
          %v2325 = vrcp.pop %v2322
          %v2326 = vmul.f32 1.0, %v2325
          %v2327 = vld [vmem:[%s274] sm:$0x3]
          %v2328 = vld [vmem:[#allocation2] sm:$0xff]
          %v2329 = vld [vmem:[#allocation2 + $0x8] sm:$0xff]
          %v2330 = vrot.slane %v2328, 4
          %v2331 = vmax.f32 %v2328, %v2330
          %v2332 = vrot.slane %v2331, 2
          %v2333 = vmax.f32 %v2331, %v2332
          %v2334 = vrot.slane %v2333, 1
          %v2335 = vmax.f32 %v2333, %v2334
          %v2336 = vrot.slane %v2329, 4
          %v2337 = vmax.f32 %v2329, %v2336
          %v2338 = vrot.slane %v2337, 2
          %v2339 = vmax.f32 %v2337, %v2338
          %v2340 = vrot.slane %v2339, 1
          %v2341 = vmax.f32 %v2339, %v2340
          %v2342 = vmul.f32 %v2335, %v2324
          %v2343 = vmul.f32 %v2341, %v2326
          %v2344 = vsel %vm2305, %v2342, 0.0
          %v2345 = vsel %vm2306, %v2343, 0.0
          %v2346 = vsub.f32 1.0, %v2344
          %v2347 = vsub.f32 1.0, %v2345
          %v2349 = vlaneseq
          %v2350 = vshrl.u32 %v2349, 7
          %v2351 = vsub.s32 0, %v2350
          %v2352 = vrot.slane %v2327, %v2351
          %v2353 = vlaneseq
          %v2354 = vshrl.u32 %v2353, 7
          %v2355 = vsub.s32 1, %v2354
          %v2356 = vrot.slane %v2327, %v2355
          %v2359 = vmul.f32 %v2346, %v2352
          %v2360 = vmul.f32 %v2347, %v2356
          %v2363 = vcombine.low %v2359, %v2360
          %v2365 = vunpack.c.l.s4 1966171168
          %v2366 = vunpack.c.0.s8 %v2365
          %v2367 = vlaneseq
          %v2368 = vshrl.u32 %v2367, 7
          %v2369 = vsub.s32 %v2366, %v2368
          %v2370 = vrot.slane %v2363, %v2369
          %v2372 = vunpack.c.l.s4 1966171168
          %v2373 = vunpack.c.0.s8 %v2372
          %v2374 = vlaneseq
          %v2375 = vshrl.u32 %v2374, 7
          %v2376 = vsub.s32 %v2373, %v2375
          %v2377 = vrot.slane %v2370, %v2376
          %v2379 = vlaneseq
          %vm2380 = vcmp.ge.s32.totalorder %v2379, 0
          %vm2381 = vcmp.lt.s32.totalorder %v2379, 256
          %vm2382 = vmand %vm2380, %vm2381
          %2383 = vst.msk [vmem:[%s262] ss:$4 sm:$0x3] %vm2382, %v2377
          %v2384 = vld [vmem:[%s1604] sm:$0xff]
          %v2385 = vld [vmem:[%s1604 + $0x8] sm:$0xff]
          %v2386 = vrot.slane %v2384, 4
          %v2387 = vmax.f32 %v2384, %v2386
          %v2388 = vrot.slane %v2387, 2
          %v2389 = vmax.f32 %v2387, %v2388
          %v2390 = vrot.slane %v2389, 1
          %v2391 = vmax.f32 %v2389, %v2390
          %v2392 = vrot.slane %v2385, 4
          %v2393 = vmax.f32 %v2385, %v2392
          %v2394 = vrot.slane %v2393, 2
          %v2395 = vmax.f32 %v2393, %v2394
          %v2396 = vrot.slane %v2395, 1
          %v2397 = vmax.f32 %v2395, %v2396
          %v2398 = vmul.f32 %v2391, %v2324
          %v2399 = vmul.f32 %v2397, %v2326
          %v2400 = vsel %vm2305, %v2398, 0.0
          %v2401 = vsel %vm2306, %v2399, 0.0
          %v2402 = vsub.f32 1.0, %v2400
          %v2403 = vsub.f32 1.0, %v2401
          %v2404 = vmul.f32 %v2402, %v2352
          %v2405 = vmul.f32 %v2403, %v2356
          %v2408 = vcombine.low %v2404, %v2405
          %v2410 = vunpack.c.l.s4 1966171168
          %v2411 = vunpack.c.0.s8 %v2410
          %v2412 = vlaneseq
          %v2413 = vshrl.u32 %v2412, 7
          %v2414 = vsub.s32 %v2411, %v2413
          %v2415 = vrot.slane %v2408, %v2414
          %v2417 = vunpack.c.l.s4 1966171168
          %v2418 = vunpack.c.0.s8 %v2417
          %v2419 = vlaneseq
          %v2420 = vshrl.u32 %v2419, 7
          %v2421 = vsub.s32 %v2418, %v2420
          %v2422 = vrot.slane %v2415, %v2421
          %s2424 = scalar_lea.vmem %s262, 1 [#allocation7]
          %2425 = vst.msk [vmem:[%s2424] ss:$4 sm:$0x3] %vm2382, %v2422
          %v2426 = vld [vmem:[%s1942] sm:$0xff]
          %v2427 = vld [vmem:[%s1942 + $0x8] sm:$0xff]
          %v2428 = vrot.slane %v2426, 4
          %v2429 = vmax.f32 %v2426, %v2428
          %v2430 = vrot.slane %v2429, 2
          %v2431 = vmax.f32 %v2429, %v2430
          %v2432 = vrot.slane %v2431, 1
          %v2433 = vmax.f32 %v2431, %v2432
          %v2434 = vrot.slane %v2427, 4
          %v2435 = vmax.f32 %v2427, %v2434
          %v2436 = vrot.slane %v2435, 2
          %v2437 = vmax.f32 %v2435, %v2436
          %v2438 = vrot.slane %v2437, 1
          %v2439 = vmax.f32 %v2437, %v2438
          %v2440 = vmul.f32 %v2433, %v2324
          %v2441 = vmul.f32 %v2439, %v2326
          %v2442 = vsel %vm2305, %v2440, 0.0
          %v2443 = vsel %vm2306, %v2441, 0.0
          %v2444 = vsub.f32 1.0, %v2442
          %v2445 = vsub.f32 1.0, %v2443
          %v2446 = vmul.f32 %v2444, %v2352
          %v2447 = vmul.f32 %v2445, %v2356
          %v2450 = vcombine.low %v2446, %v2447
          %v2452 = vunpack.c.l.s4 1966171168
          %v2453 = vunpack.c.0.s8 %v2452
          %v2454 = vlaneseq
          %v2455 = vshrl.u32 %v2454, 7
          %v2456 = vsub.s32 %v2453, %v2455
          %v2457 = vrot.slane %v2450, %v2456
          %v2459 = vunpack.c.l.s4 1966171168
          %v2460 = vunpack.c.0.s8 %v2459
          %v2461 = vlaneseq
          %v2462 = vshrl.u32 %v2461, 7
          %v2463 = vsub.s32 %v2460, %v2462
          %v2464 = vrot.slane %v2457, %v2463
          %s2466 = scalar_lea.vmem %s262, 2 [#allocation7]
          %2467 = vst.msk [vmem:[%s2466] ss:$4 sm:$0x3] %vm2382, %v2464
          %v2468 = vld [vmem:[%s2280] sm:$0xff]
          %v2469 = vld [vmem:[%s2280 + $0x8] sm:$0xff]
          %v2470 = vrot.slane %v2468, 4
          %v2471 = vmax.f32 %v2468, %v2470
          %v2472 = vrot.slane %v2471, 2
          %v2473 = vmax.f32 %v2471, %v2472
          %v2474 = vrot.slane %v2473, 1
          %v2475 = vmax.f32 %v2473, %v2474
          %v2476 = vrot.slane %v2469, 4
          %v2477 = vmax.f32 %v2469, %v2476
          %v2478 = vrot.slane %v2477, 2
          %v2479 = vmax.f32 %v2477, %v2478
          %v2480 = vrot.slane %v2479, 1
          %v2481 = vmax.f32 %v2479, %v2480
          %v2482 = vmul.f32 %v2475, %v2324
          %v2483 = vmul.f32 %v2481, %v2326
          %v2484 = vsel %vm2305, %v2482, 0.0
          %v2485 = vsel %vm2306, %v2483, 0.0
          %v2486 = vsub.f32 1.0, %v2484
          %v2487 = vsub.f32 1.0, %v2485
          %v2488 = vmul.f32 %v2486, %v2352
          %v2489 = vmul.f32 %v2487, %v2356
          %v2492 = vcombine.low %v2488, %v2489
          %v2494 = vunpack.c.l.s4 1966171168
          %v2495 = vunpack.c.0.s8 %v2494
          %v2496 = vlaneseq
          %v2497 = vshrl.u32 %v2496, 7
          %v2498 = vsub.s32 %v2495, %v2497
          %v2499 = vrot.slane %v2492, %v2498
          %v2501 = vunpack.c.l.s4 1966171168
          %v2502 = vunpack.c.0.s8 %v2501
          %v2503 = vlaneseq
          %v2504 = vshrl.u32 %v2503, 7
          %v2505 = vsub.s32 %v2502, %v2504
          %v2506 = vrot.slane %v2499, %v2505
          %s2508 = scalar_lea.vmem %s262, 3 [#allocation7]
          %2509 = vst.msk [vmem:[%s2508] ss:$4 sm:$0x3] %vm2382, %v2506
        $region48: #{tpu_custom_call.1} parent=35 // pred_fallthru
          _
        %s2510 = sand.u32 %s142, 1
        %s2511 = scalar_lea.sflag [#allocation6], %s2510
        %s2512 = sand.u32 %s142, 1
        %s2513 = smul.addr %s2512, 8
        %s2514 = scalar_lea.vmem [#allocation7], %s2513
        // Predicated region
        $region49: #{tpu_custom_call.1} parent=35 // pred_check
          %p2515 = pneg %p152
        $region50: #{tpu_custom_call.1} parent=35 // pred_check_branch
          %2517 = sbr.rel (%p2515) target = $region52
        $region51: #{tpu_custom_call.1} parent=35 // pred_region
          %s2518 = smul.u32 2, %s25
          %s2520 = ssub.s32 128, 128
          %2521 = vsyncadd %s2511, %s2520
          %s2522 = smul.addr %s2518, 64
          %s2523 = scalar_lea.hbm %s4, %s2522
          %s2525 = sshll.u32 %s2514, 4
          %s2526 = int_to_ptr.vmem [resolvable:$true] %s2525
          %2528 = dma.vmem_to_hbm [thread:$0]  %s2526, 128, %s2523, %s2511
        $region52: #{tpu_custom_call.1} parent=35 // pred_fallthru
          _
      $region36: #{tpu_custom_call.1} parent=5 // pred_fallthru
        _
      %p2529 = scmp.le.s32.totalorder 2, %s16
      // Predicated region
      $region53: #{tpu_custom_call.1} parent=5 // pred_check
        %p2530 = pneg %p2529
      $region54: #{tpu_custom_call.1} parent=5 // pred_check_branch
        %2532 = sbr.rel (%p2530) target = $region56
      $region55: #{tpu_custom_call.1} parent=5 // pred_region
        %s2533 = ssub.s32 %s16, 2
        // Predicated region
        $region57: #{tpu_custom_call.1} parent=55 // pred_check
          %p2534 = pneg %p158
        $region58: #{tpu_custom_call.1} parent=55 // pred_check_branch
          %2536 = sbr.rel (%p2534) target = $region60
        $region59: #{tpu_custom_call.1} parent=55 // pred_region
          %s2537 = sand.u32 %s143, 1
          %s2538 = scalar_lea.sflag [#allocation6], %s2537
          %s2539 = sand.u32 %s143, 1
          %s2540 = smul.addr %s2539, 8
          %s2541 = scalar_lea.vmem [#allocation7], %s2540
          %2542 = dma.done %s2538, 128
        $region60: #{tpu_custom_call.1} parent=55 // pred_fallthru
          _
      $region56: #{tpu_custom_call.1} parent=5 // pred_fallthru
        _
    $region6: #{tpu_custom_call.1} parent=1 // loop_footer
      %s20 = sadd.s32 1, %s16
    $region7: #{tpu_custom_call.1} parent=1 // loop_footer_branch
      %15 = sbr.rel target = $region3
    $region8: #{tpu_custom_call.1} parent=1 // loop_exit
      _
    %2543 = vsyncpa [#allocation5], 1
    %s2544 = scalar_lea.sflag [#allocation5], 1
    %2545 = vsyncpa %s2544, 1
    %2546 = vsyncpa [#allocation6], 1
    %s2547 = scalar_lea.sflag [#allocation6], 1
    %2548 = vsyncpa %s2547, 1

</llo_original>
